<compile_context>
chip_gen: v7x
topology: tpu7x:2x2x1
jax: 0.10.0
libtpu: 0.0.40
codegen_flags: <defaults>
</compile_context>

<pallas_src>
import jax
import jax.numpy as jnp
import numpy as np
from jax.experimental import pallas as pl
from jax.experimental.pallas import tpu as pltpu


def _sigmoid_eup(x):
    # Divide-free sigmoid: exact identity sigmoid(x) = 0.5*(1 + tanh(x/2)).
    # tanh runs on the EUP slot; no f32 divide on the serial path.
    return 0.5 + 0.5 * jnp.tanh(0.5 * x)


# ----------------------------------------------------------------------------
# Fused kernel: hoisted input projection + GRU recurrence + scoring epilogue.
# ----------------------------------------------------------------------------
def _dual_encoder_kernel(len_ref, x_ref, wih_ref, whh_ref, bg_ref, bhn_ref,
                         wlin_ref, blin_ref, selc_ref, selo_ref,
                         out_ref, gates_scr, mask_scr):
    T, Bp, E = x_ref.shape
    H3 = whh_ref.shape[-1]
    H = H3 // 3
    H2 = 2 * H

    # ---- prologue (all off the serial critical path) ------------------------
    # (1) hoisted input projection: one packed (T*Bp, E) @ (E, 3H) MXU matmul.
    #     bg already contains b_ih (all gates) + b_hh (r|z gates only).
    x2d = x_ref[...].reshape(T * Bp, E)            # Bp % 8 == 0 -> layout-safe
    gates_scr[...] = (
        jnp.dot(x2d, wih_ref[...], preferred_element_type=jnp.float32)
        + bg_ref[...]
    ).reshape(T, Bp, H3)

    # (2) freeze masks, precomputed full-width once: no per-step int compare or
    #     (Bp,1)->(Bp,H) broadcast inside the unrolled recurrence.
    t_iota = jax.lax.broadcasted_iota(jnp.int32, (T, Bp, H), 0)
    mask_scr[...] = (t_iota < len_ref[...][None, :, :]).astype(jnp.float32)

    # (3) hoist W_hh / b_hn so the unrolled loop does not re-load them.
    whh = whh_ref[...]                             # (H, 3H)
    bhn = jnp.broadcast_to(bhn_ref[...], (Bp, H))  # (Bp, H), broadcast once

    # ---- serial GRU recurrence ----------------------------------------------
    def step(t, h):
        gi = gates_scr[t]                          # (Bp, 3H)
        gh = jnp.dot(h, whh, preferred_element_type=jnp.float32)   # (Bp, 3H)
        # slab sigmoid over the r|z halves (offset-0 lane slices are cheap)
        rz = _sigmoid_eup(gi[:, :H2] + gh[:, :H2])                 # (Bp, 2H)
        r = rz[:, :H]
        z = rz[:, H:]
        n = jnp.tanh(gi[:, H2:] + r * (gh[:, H2:] + bhn))
        # fused GRU update + length freeze:
        #   where(t < len, (1-z)*n + z*h, h)  ==  h + m*(1-z)*(n-h)
        m = mask_scr[t]                            # (Bp, H) precomputed f32
        return h + (m * (1.0 - z)) * (n - h)

    h0 = jnp.zeros((Bp, H), jnp.float32)
    h_last = jax.lax.fori_loop(0, T, step, h0,
                               unroll=True if T <= 16 else 8)

    # ---- fused scoring epilogue: Linear on context, dot per option, sigmoid.
    # One-hot selection matmuls replace per-b slices/concat of h_last.
    c_all = jnp.dot(h_last, wlin_ref[...],
                    preferred_element_type=jnp.float32) + blin_ref[...]  # (Bp,H)
    c_rep = jnp.dot(selc_ref[...], c_all,
                    preferred_element_type=jnp.float32)                  # (BN,H)
    opt = jnp.dot(selo_ref[...], h_last,
                  preferred_element_type=jnp.float32)                    # (BN,H)
    logit = jnp.sum(c_rep * opt, axis=-1, keepdims=True)                 # (BN,1)
    out_ref[...] = _sigmoid_eup(logit)


# ----------------------------------------------------------------------------
# Wrapper: merge context + options into one batch and call the kernel once.
# ----------------------------------------------------------------------------
def dual_encoder_forward(params, context, context_len, options, option_lens):
    B, Tc, E = context.shape
    _, N, To, _ = options.shape
    H = params["b_lin"].shape[-1]
    T = max(Tc, To)
    BN = B * N
    Btot = B + BN
    Bp = ((Btot + 7) // 8) * 8

    # TODO(synk): at production T*Bp*E sizes this pad/concat/transpose should
    # move into a gridded kernel whose index_map reads (t, batch-tile) tiles
    # directly; negligible HBM traffic at these toy shapes.
    ctx = jnp.pad(context, ((0, 0), (0, T - Tc), (0, 0)))
    opt = jnp.pad(options.reshape(BN, To, E), ((0, 0), (0, T - To), (0, 0)))
    x_all = jnp.concatenate([ctx, opt], axis=0)                    # (Btot,T,E)
    lens = jnp.concatenate([context_len.reshape(B),
                            option_lens.reshape(BN)]).astype(jnp.int32)
    if Bp > Btot:
        x_all = jnp.pad(x_all, ((0, Bp - Btot), (0, 0), (0, 0)))
        lens = jnp.pad(lens, (0, Bp - Btot))
    x_tbe = jnp.transpose(x_all, (1, 0, 2))                        # (T, Bp, E)
    lens2d = lens.reshape(Bp, 1)

    # Bias folding: r|z thirds of b_hh are added to the hoisted-projection
    # bias; only b_hn stays on the per-step path (inside r*(...)).
    b_gates = params["b_i"].at[:, :2 * H].add(params["b_h"][:, :2 * H])
    b_hn = params["b_h"][:, 2 * H:]

    # Static one-hot selection matrices for the fused epilogue.
    sel_ctx = np.zeros((BN, Bp), np.float32)
    sel_ctx[np.arange(BN), np.arange(BN) // N] = 1.0               # replicate c_b
    sel_opt = np.zeros((BN, Bp), np.float32)
    sel_opt[np.arange(BN), B + np.arange(BN)] = 1.0                # pick opt rows

    out = pl.pallas_call(
        _dual_encoder_kernel,
        out_shape=jax.ShapeDtypeStruct((BN, 1), jnp.float32),
        in_specs=[pl.BlockSpec(memory_space=pltpu.MemorySpace.VMEM)] * 10,
        out_specs=pl.BlockSpec(memory_space=pltpu.MemorySpace.VMEM),
        scratch_shapes=[pltpu.VMEM((T, Bp, 3 * H), jnp.float32),   # gates
                        pltpu.VMEM((T, Bp, H), jnp.float32)],      # freeze mask
    )(lens2d, x_tbe, params["w_ih"], params["w_hh"], b_gates, b_hn,
      params["w_lin_t"], params["b_lin"],
      jnp.asarray(sel_ctx), jnp.asarray(sel_opt))
    return out.reshape(B, N)


# ----------------------------------------------------------------------------
# Parameters (deterministic, mirroring nn.GRU + nn.Linear shapes)
# ----------------------------------------------------------------------------
def init_params(key, dim_embedding, hidden_size):
    k1, k2, k3, k4, k5, k6 = jax.random.split(key, 6)
    ortho = jax.nn.initializers.orthogonal()
    # PyTorch layout: weight_ih (3H, E), weight_hh (3H, H), orthogonal init,
    # gate order (r, z, n).
    w_ih_pt = ortho(k1, (3 * hidden_size, dim_embedding), jnp.float32)
    w_hh_pt = ortho(k2, (3 * hidden_size, hidden_size), jnp.float32)
    bound = 1.0 / np.sqrt(hidden_size)
    b_ih = jax.random.uniform(k3, (3 * hidden_size,), jnp.float32, -bound, bound)
    b_hh = jax.random.uniform(k4, (3 * hidden_size,), jnp.float32, -bound, bound)
    w_lin = jax.random.uniform(k5, (hidden_size, hidden_size), jnp.float32,
                               -bound, bound)                  # (out, in)
    b_lin = jax.random.uniform(k6, (hidden_size,), jnp.float32, -bound, bound)
    return dict(
        w_ih=w_ih_pt.T,                          # (E, 3H), columns packed r|z|n
        w_hh=w_hh_pt.T,                          # (H, 3H)
        b_i=b_ih.reshape(1, 3 * hidden_size),
        b_h=b_hh.reshape(1, 3 * hidden_size),
        w_lin_t=w_lin.T,                         # kernel computes x @ W^T
        b_lin=b_lin.reshape(1, hidden_size),
    )


# ----------------------------------------------------------------------------
# Pure-JAX reference (for correctness check)
# ----------------------------------------------------------------------------
def gru_last_ref(x_tbe, lengths, w_ih, w_hh, b_i, b_h):
    T, B, _ = x_tbe.shape
    H = w_hh.shape[0]
    h0 = jnp.zeros((B, H), jnp.float32)

    def step(h, inp):
        x_t, t = inp
        gi = x_t @ w_ih + b_i
        gh = h @ w_hh + b_h
        r = jax.nn.sigmoid(gi[:, :H] + gh[:, :H])
        z = jax.nn.sigmoid(gi[:, H:2 * H] + gh[:, H:2 * H])
        n = jnp.tanh(gi[:, 2 * H:] + r * gh[:, 2 * H:])
        h_new = (1.0 - z) * n + z * h
        return jnp.where((t < lengths)[:, None], h_new, h), None

    h_last, _ = jax.lax.scan(step, h0, (x_tbe, jnp.arange(T)))
    return h_last


def forward_ref(params, context, context_len, options, option_lens):
    B, Tc, E = context.shape
    _, N, To, _ = options.shape
    H = params["b_lin"].shape[-1]
    ctx_tbe = jnp.transpose(context, (1, 0, 2))
    ctx_pooled = gru_last_ref(ctx_tbe, context_len, params["w_ih"],
                              params["w_hh"], params["b_i"], params["b_h"])
    opt_tbe = jnp.transpose(options.reshape(B * N, To, E), (1, 0, 2))
    opt_pooled = gru_last_ref(opt_tbe, option_lens.reshape(B * N),
                              params["w_ih"], params["w_hh"],
                              params["b_i"], params["b_h"]).reshape(B, N, H)
    c = ctx_pooled @ params["w_lin_t"] + params["b_lin"]
    return jax.nn.sigmoid(jnp.sum(c[:, None, :] * opt_pooled, axis=-1))


if __name__ == "__main__":
    key = jax.random.PRNGKey(0)
    B, N = 2, 3
    Tc, To = 10, 8
    E, H = 16, 32

    kp, kc, ko = jax.random.split(key, 3)
    params = init_params(kp, dim_embedding=E, hidden_size=H)

    context = jax.random.normal(kc, (B, Tc, E), jnp.float32)
    options = jax.random.normal(ko, (B, N, To, E), jnp.float32)
    context_len = jnp.array([Tc, 7], dtype=jnp.int32)
    option_lens = jnp.array([[8, 5, 3], [6, 8, 2]], dtype=jnp.int32)

    logits = dual_encoder_forward(params, context, context_len,
                                  options, option_lens)
    logits = jax.block_until_ready(logits)

    logits_ref = forward_ref(params, context, context_len, options, option_lens)
    np.testing.assert_allclose(np.asarray(logits), np.asarray(logits_ref),
                               atol=1e-4, rtol=1e-4)
    assert logits.shape == (B, N)
    print("KERNEL_OK")
</pallas_src>

<mosaic_0001>
module attributes {stable_mosaic.version = 11 : i64} {
  func.func @_dual_encoder_kernel(%arg0: memref<8x1xi32, #tpu.memory_space<vmem>>, %arg1: memref<10x8x16xf32, #tpu.memory_space<vmem>>, %arg2: memref<16x96xf32, #tpu.memory_space<vmem>>, %arg3: memref<32x96xf32, #tpu.memory_space<vmem>>, %arg4: memref<1x96xf32, #tpu.memory_space<vmem>>, %arg5: memref<1x32xf32, #tpu.memory_space<vmem>>, %arg6: memref<32x32xf32, #tpu.memory_space<vmem>>, %arg7: memref<1x32xf32, #tpu.memory_space<vmem>>, %arg8: memref<6x8xf32, #tpu.memory_space<vmem>>, %arg9: memref<6x8xf32, #tpu.memory_space<vmem>>, %arg10: memref<6x1xf32, #tpu.memory_space<vmem>>, %arg11: memref<10x8x96xf32, #tpu.memory_space<vmem>>, %arg12: memref<10x8x32xf32, #tpu.memory_space<vmem>>) attributes {dimension_semantics = [], scalar_prefetch = 0 : i64, scratch_operands = 2 : i64, tpu.core_type = #tpu.core_type<tc>} {
    %c0 = arith.constant 0 : index
    %c0_0 = arith.constant 0 : index
    %c0_1 = arith.constant 0 : index
    %0 = vector.load %arg1[%c0, %c0_0, %c0_1] : memref<10x8x16xf32, #tpu.memory_space<vmem>>, vector<10x8x16xf32>
    %1 = vector.shape_cast %0 : vector<10x8x16xf32> to vector<80x16xf32>
    %c0_2 = arith.constant 0 : index
    %c0_3 = arith.constant 0 : index
    %2 = vector.load %arg2[%c0_2, %c0_3] : memref<16x96xf32, #tpu.memory_space<vmem>>, vector<16x96xf32>
    %cst = arith.constant dense<0.000000e+00> : vector<80x96xf32>
    %3 = tpu.matmul %1, %2, %cst {dimension_numbers = #tpu.dot_dimension_numbers<[1], [0], [0], [1], [0, 0, 1, 1], [], []>} : vector<80x16xf32>, vector<16x96xf32>, vector<80x96xf32> -> vector<80x96xf32>
    %c0_4 = arith.constant 0 : index
    %c0_5 = arith.constant 0 : index
    %4 = vector.load %arg4[%c0_4, %c0_5] : memref<1x96xf32, #tpu.memory_space<vmem>>, vector<1x96xf32>
    %5 = vector.broadcast %4 : vector<1x96xf32> to vector<80x96xf32>
    %6 = arith.addf %3, %5 : vector<80x96xf32>
    %7 = vector.shape_cast %6 : vector<80x96xf32> to vector<10x8x96xf32>
    %c0_6 = arith.constant 0 : index
    %c0_7 = arith.constant 0 : index
    %c0_8 = arith.constant 0 : index
    %8 = vector.load %arg11[%c0_6, %c0_7, %c0_8] : memref<10x8x96xf32, #tpu.memory_space<vmem>>, vector<10x8x96xf32>
    tpu.vector_store %arg11[%c0_6, %c0_7, %c0_8], %7 {strides = array<i32>} : memref<10x8x96xf32, #tpu.memory_space<vmem>>, vector<10x8x96xf32>,
    %9 = tpu.iota {dimensions = array<i32: 0>} : vector<10x8x32xi32>
    %c0_9 = arith.constant 0 : index
    %c0_10 = arith.constant 0 : index
    %10 = vector.load %arg0[%c0_9, %c0_10] : memref<8x1xi32, #tpu.memory_space<vmem>>, vector<8x1xi32>
    %11 = vector.shape_cast %10 : vector<8x1xi32> to vector<1x8x1xi32>
    %12 = vector.broadcast %11 : vector<1x8x1xi32> to vector<10x8x32xi32>
    %13 = arith.cmpi slt, %9, %12 : vector<10x8x32xi32>
    %14 = arith.extui %13 : vector<10x8x32xi1> to vector<10x8x32xi32>
    %15 = arith.sitofp %14 : vector<10x8x32xi32> to vector<10x8x32xf32>
    %c0_11 = arith.constant 0 : index
    %c0_12 = arith.constant 0 : index
    %c0_13 = arith.constant 0 : index
    %16 = vector.load %arg12[%c0_11, %c0_12, %c0_13] : memref<10x8x32xf32, #tpu.memory_space<vmem>>, vector<10x8x32xf32>
    tpu.vector_store %arg12[%c0_11, %c0_12, %c0_13], %15 {strides = array<i32>} : memref<10x8x32xf32, #tpu.memory_space<vmem>>, vector<10x8x32xf32>,
    %c0_14 = arith.constant 0 : index
    %c0_15 = arith.constant 0 : index
    %17 = vector.load %arg3[%c0_14, %c0_15] : memref<32x96xf32, #tpu.memory_space<vmem>>, vector<32x96xf32>
    %c0_16 = arith.constant 0 : index
    %c0_17 = arith.constant 0 : index
    %18 = vector.load %arg5[%c0_16, %c0_17] : memref<1x32xf32, #tpu.memory_space<vmem>>, vector<1x32xf32>
    %19 = vector.shape_cast %18 : vector<1x32xf32> to vector<1x32xf32>
    %20 = vector.broadcast %19 : vector<1x32xf32> to vector<8x32xf32>
    %cst_18 = arith.constant 0.000000e+00 : f32
    %21 = vector.broadcast %cst_18 : f32 to vector<8x32xf32>
    %c0_i32 = arith.constant 0 : i32
    %22 = arith.index_cast %c0_i32 : i32 to index
    %c0_19 = arith.constant 0 : index
    %c0_20 = arith.constant 0 : index
    %23 = vector.load %arg11[%22, %c0_19, %c0_20] : memref<10x8x96xf32, #tpu.memory_space<vmem>>, vector<1x8x96xf32>
    %24 = vector.shape_cast %23 : vector<1x8x96xf32> to vector<8x96xf32>
    %cst_21 = arith.constant dense<0.000000e+00> : vector<8x96xf32>
    %25 = tpu.matmul %21, %17, %cst_21 {dimension_numbers = #tpu.dot_dimension_numbers<[1], [0], [0], [1], [0, 0, 1, 1], [], []>} : vector<8x32xf32>, vector<32x96xf32>, vector<8x96xf32> -> vector<8x96xf32>
    %26 = vector.extract_strided_slice %24 {offsets = [0, 0], sizes = [8, 64], strides = [1, 1]} : vector<8x96xf32> to vector<8x64xf32>
    %27 = vector.extract_strided_slice %25 {offsets = [0, 0], sizes = [8, 64], strides = [1, 1]} : vector<8x96xf32> to vector<8x64xf32>
    %28 = arith.addf %26, %27 : vector<8x64xf32>
    %cst_22 = arith.constant 5.000000e-01 : f32
    %29 = vector.broadcast %cst_22 : f32 to vector<8x64xf32>
    %30 = arith.mulf %29, %28 : vector<8x64xf32>
    %31 = math.tanh %30 : vector<8x64xf32>
    %cst_23 = arith.constant 5.000000e-01 : f32
    %32 = vector.broadcast %cst_23 : f32 to vector<8x64xf32>
    %33 = arith.mulf %32, %31 : vector<8x64xf32>
    %cst_24 = arith.constant 5.000000e-01 : f32
    %34 = vector.broadcast %cst_24 : f32 to vector<8x64xf32>
    %35 = arith.addf %34, %33 : vector<8x64xf32>
    %36 = vector.extract_strided_slice %35 {offsets = [0, 0], sizes = [8, 32], strides = [1, 1]} : vector<8x64xf32> to vector<8x32xf32>
    %37 = vector.extract_strided_slice %35 {offsets = [0, 32], sizes = [8, 32], strides = [1, 1]} : vector<8x64xf32> to vector<8x32xf32>
    %38 = vector.extract_strided_slice %24 {offsets = [0, 64], sizes = [8, 32], strides = [1, 1]} : vector<8x96xf32> to vector<8x32xf32>
    %39 = vector.extract_strided_slice %25 {offsets = [0, 64], sizes = [8, 32], strides = [1, 1]} : vector<8x96xf32> to vector<8x32xf32>
    %40 = arith.addf %39, %20 : vector<8x32xf32>
    %41 = arith.mulf %36, %40 : vector<8x32xf32>
    %42 = arith.addf %38, %41 : vector<8x32xf32>
    %43 = math.tanh %42 : vector<8x32xf32>
    %44 = arith.index_cast %c0_i32 : i32 to index
    %c0_25 = arith.constant 0 : index
    %c0_26 = arith.constant 0 : index
    %45 = vector.load %arg12[%44, %c0_25, %c0_26] : memref<10x8x32xf32, #tpu.memory_space<vmem>>, vector<1x8x32xf32>
    %46 = vector.shape_cast %45 : vector<1x8x32xf32> to vector<8x32xf32>
    %cst_27 = arith.constant 1.000000e+00 : f32
    %47 = vector.broadcast %cst_27 : f32 to vector<8x32xf32>
    %48 = arith.subf %47, %37 : vector<8x32xf32>
    %49 = arith.mulf %46, %48 : vector<8x32xf32>
    %50 = arith.subf %43, %21 : vector<8x32xf32>
    %51 = arith.mulf %49, %50 : vector<8x32xf32>
    %52 = arith.addf %21, %51 : vector<8x32xf32>
    %c1_i32 = arith.constant 1 : i32
    %53 = arith.index_cast %c1_i32 : i32 to index
    %c0_28 = arith.constant 0 : index
    %c0_29 = arith.constant 0 : index
    %54 = vector.load %arg11[%53, %c0_28, %c0_29] : memref<10x8x96xf32, #tpu.memory_space<vmem>>, vector<1x8x96xf32>
    %55 = vector.shape_cast %54 : vector<1x8x96xf32> to vector<8x96xf32>
    %cst_30 = arith.constant dense<0.000000e+00> : vector<8x96xf32>
    %56 = tpu.matmul %52, %17, %cst_30 {dimension_numbers = #tpu.dot_dimension_numbers<[1], [0], [0], [1], [0, 0, 1, 1], [], []>} : vector<8x32xf32>, vector<32x96xf32>, vector<8x96xf32> -> vector<8x96xf32>
    %57 = vector.extract_strided_slice %55 {offsets = [0, 0], sizes = [8, 64], strides = [1, 1]} : vector<8x96xf32> to vector<8x64xf32>
    %58 = vector.extract_strided_slice %56 {offsets = [0, 0], sizes = [8, 64], strides = [1, 1]} : vector<8x96xf32> to vector<8x64xf32>
    %59 = arith.addf %57, %58 : vector<8x64xf32>
    %cst_31 = arith.constant 5.000000e-01 : f32
    %60 = vector.broadcast %cst_31 : f32 to vector<8x64xf32>
    %61 = arith.mulf %60, %59 : vector<8x64xf32>
    %62 = math.tanh %61 : vector<8x64xf32>
    %cst_32 = arith.constant 5.000000e-01 : f32
    %63 = vector.broadcast %cst_32 : f32 to vector<8x64xf32>
    %64 = arith.mulf %63, %62 : vector<8x64xf32>
    %cst_33 = arith.constant 5.000000e-01 : f32
    %65 = vector.broadcast %cst_33 : f32 to vector<8x64xf32>
    %66 = arith.addf %65, %64 : vector<8x64xf32>
    %67 = vector.extract_strided_slice %66 {offsets = [0, 0], sizes = [8, 32], strides = [1, 1]} : vector<8x64xf32> to vector<8x32xf32>
    %68 = vector.extract_strided_slice %66 {offsets = [0, 32], sizes = [8, 32], strides = [1, 1]} : vector<8x64xf32> to vector<8x32xf32>
    %69 = vector.extract_strided_slice %55 {offsets = [0, 64], sizes = [8, 32], strides = [1, 1]} : vector<8x96xf32> to vector<8x32xf32>
    %70 = vector.extract_strided_slice %56 {offsets = [0, 64], sizes = [8, 32], strides = [1, 1]} : vector<8x96xf32> to vector<8x32xf32>
    %71 = arith.addf %70, %20 : vector<8x32xf32>
    %72 = arith.mulf %67, %71 : vector<8x32xf32>
    %73 = arith.addf %69, %72 : vector<8x32xf32>
    %74 = math.tanh %73 : vector<8x32xf32>
    %75 = arith.index_cast %c1_i32 : i32 to index
    %c0_34 = arith.constant 0 : index
    %c0_35 = arith.constant 0 : index
    %76 = vector.load %arg12[%75, %c0_34, %c0_35] : memref<10x8x32xf32, #tpu.memory_space<vmem>>, vector<1x8x32xf32>
    %77 = vector.shape_cast %76 : vector<1x8x32xf32> to vector<8x32xf32>
    %cst_36 = arith.constant 1.000000e+00 : f32
    %78 = vector.broadcast %cst_36 : f32 to vector<8x32xf32>
    %79 = arith.subf %78, %68 : vector<8x32xf32>
    %80 = arith.mulf %77, %79 : vector<8x32xf32>
    %81 = arith.subf %74, %52 : vector<8x32xf32>
    %82 = arith.mulf %80, %81 : vector<8x32xf32>
    %83 = arith.addf %52, %82 : vector<8x32xf32>
    %c2_i32 = arith.constant 2 : i32
    %84 = arith.index_cast %c2_i32 : i32 to index
    %c0_37 = arith.constant 0 : index
    %c0_38 = arith.constant 0 : index
    %85 = vector.load %arg11[%84, %c0_37, %c0_38] : memref<10x8x96xf32, #tpu.memory_space<vmem>>, vector<1x8x96xf32>
    %86 = vector.shape_cast %85 : vector<1x8x96xf32> to vector<8x96xf32>
    %cst_39 = arith.constant dense<0.000000e+00> : vector<8x96xf32>
    %87 = tpu.matmul %83, %17, %cst_39 {dimension_numbers = #tpu.dot_dimension_numbers<[1], [0], [0], [1], [0, 0, 1, 1], [], []>} : vector<8x32xf32>, vector<32x96xf32>, vector<8x96xf32> -> vector<8x96xf32>
    %88 = vector.extract_strided_slice %86 {offsets = [0, 0], sizes = [8, 64], strides = [1, 1]} : vector<8x96xf32> to vector<8x64xf32>
    %89 = vector.extract_strided_slice %87 {offsets = [0, 0], sizes = [8, 64], strides = [1, 1]} : vector<8x96xf32> to vector<8x64xf32>
    %90 = arith.addf %88, %89 : vector<8x64xf32>
    %cst_40 = arith.constant 5.000000e-01 : f32
    %91 = vector.broadcast %cst_40 : f32 to vector<8x64xf32>
    %92 = arith.mulf %91, %90 : vector<8x64xf32>
    %93 = math.tanh %92 : vector<8x64xf32>
    %cst_41 = arith.constant 5.000000e-01 : f32
    %94 = vector.broadcast %cst_41 : f32 to vector<8x64xf32>
    %95 = arith.mulf %94, %93 : vector<8x64xf32>
    %cst_42 = arith.constant 5.000000e-01 : f32
    %96 = vector.broadcast %cst_42 : f32 to vector<8x64xf32>
    %97 = arith.addf %96, %95 : vector<8x64xf32>
    %98 = vector.extract_strided_slice %97 {offsets = [0, 0], sizes = [8, 32], strides = [1, 1]} : vector<8x64xf32> to vector<8x32xf32>
    %99 = vector.extract_strided_slice %97 {offsets = [0, 32], sizes = [8, 32], strides = [1, 1]} : vector<8x64xf32> to vector<8x32xf32>
    %100 = vector.extract_strided_slice %86 {offsets = [0, 64], sizes = [8, 32], strides = [1, 1]} : vector<8x96xf32> to vector<8x32xf32>
    %101 = vector.extract_strided_slice %87 {offsets = [0, 64], sizes = [8, 32], strides = [1, 1]} : vector<8x96xf32> to vector<8x32xf32>
    %102 = arith.addf %101, %20 : vector<8x32xf32>
    %103 = arith.mulf %98, %102 : vector<8x32xf32>
    %104 = arith.addf %100, %103 : vector<8x32xf32>
    %105 = math.tanh %104 : vector<8x32xf32>
    %106 = arith.index_cast %c2_i32 : i32 to index
    %c0_43 = arith.constant 0 : index
    %c0_44 = arith.constant 0 : index
    %107 = vector.load %arg12[%106, %c0_43, %c0_44] : memref<10x8x32xf32, #tpu.memory_space<vmem>>, vector<1x8x32xf32>
    %108 = vector.shape_cast %107 : vector<1x8x32xf32> to vector<8x32xf32>
    %cst_45 = arith.constant 1.000000e+00 : f32
    %109 = vector.broadcast %cst_45 : f32 to vector<8x32xf32>
    %110 = arith.subf %109, %99 : vector<8x32xf32>
    %111 = arith.mulf %108, %110 : vector<8x32xf32>
    %112 = arith.subf %105, %83 : vector<8x32xf32>
    %113 = arith.mulf %111, %112 : vector<8x32xf32>
    %114 = arith.addf %83, %113 : vector<8x32xf32>
    %c3_i32 = arith.constant 3 : i32
    %115 = arith.index_cast %c3_i32 : i32 to index
    %c0_46 = arith.constant 0 : index
    %c0_47 = arith.constant 0 : index
    %116 = vector.load %arg11[%115, %c0_46, %c0_47] : memref<10x8x96xf32, #tpu.memory_space<vmem>>, vector<1x8x96xf32>
    %117 = vector.shape_cast %116 : vector<1x8x96xf32> to vector<8x96xf32>
    %cst_48 = arith.constant dense<0.000000e+00> : vector<8x96xf32>
    %118 = tpu.matmul %114, %17, %cst_48 {dimension_numbers = #tpu.dot_dimension_numbers<[1], [0], [0], [1], [0, 0, 1, 1], [], []>} : vector<8x32xf32>, vector<32x96xf32>, vector<8x96xf32> -> vector<8x96xf32>
    %119 = vector.extract_strided_slice %117 {offsets = [0, 0], sizes = [8, 64], strides = [1, 1]} : vector<8x96xf32> to vector<8x64xf32>
    %120 = vector.extract_strided_slice %118 {offsets = [0, 0], sizes = [8, 64], strides = [1, 1]} : vector<8x96xf32> to vector<8x64xf32>
    %121 = arith.addf %119, %120 : vector<8x64xf32>
    %cst_49 = arith.constant 5.000000e-01 : f32
    %122 = vector.broadcast %cst_49 : f32 to vector<8x64xf32>
    %123 = arith.mulf %122, %121 : vector<8x64xf32>
    %124 = math.tanh %123 : vector<8x64xf32>
    %cst_50 = arith.constant 5.000000e-01 : f32
    %125 = vector.broadcast %cst_50 : f32 to vector<8x64xf32>
    %126 = arith.mulf %125, %124 : vector<8x64xf32>
    %cst_51 = arith.constant 5.000000e-01 : f32
    %127 = vector.broadcast %cst_51 : f32 to vector<8x64xf32>
    %128 = arith.addf %127, %126 : vector<8x64xf32>
    %129 = vector.extract_strided_slice %128 {offsets = [0, 0], sizes = [8, 32], strides = [1, 1]} : vector<8x64xf32> to vector<8x32xf32>
    %130 = vector.extract_strided_slice %128 {offsets = [0, 32], sizes = [8, 32], strides = [1, 1]} : vector<8x64xf32> to vector<8x32xf32>
    %131 = vector.extract_strided_slice %117 {offsets = [0, 64], sizes = [8, 32], strides = [1, 1]} : vector<8x96xf32> to vector<8x32xf32>
    %132 = vector.extract_strided_slice %118 {offsets = [0, 64], sizes = [8, 32], strides = [1, 1]} : vector<8x96xf32> to vector<8x32xf32>
    %133 = arith.addf %132, %20 : vector<8x32xf32>
    %134 = arith.mulf %129, %133 : vector<8x32xf32>
    %135 = arith.addf %131, %134 : vector<8x32xf32>
    %136 = math.tanh %135 : vector<8x32xf32>
    %137 = arith.index_cast %c3_i32 : i32 to index
    %c0_52 = arith.constant 0 : index
    %c0_53 = arith.constant 0 : index
    %138 = vector.load %arg12[%137, %c0_52, %c0_53] : memref<10x8x32xf32, #tpu.memory_space<vmem>>, vector<1x8x32xf32>
    %139 = vector.shape_cast %138 : vector<1x8x32xf32> to vector<8x32xf32>
    %cst_54 = arith.constant 1.000000e+00 : f32
    %140 = vector.broadcast %cst_54 : f32 to vector<8x32xf32>
    %141 = arith.subf %140, %130 : vector<8x32xf32>
    %142 = arith.mulf %139, %141 : vector<8x32xf32>
    %143 = arith.subf %136, %114 : vector<8x32xf32>
    %144 = arith.mulf %142, %143 : vector<8x32xf32>
    %145 = arith.addf %114, %144 : vector<8x32xf32>
    %c4_i32 = arith.constant 4 : i32
    %146 = arith.index_cast %c4_i32 : i32 to index
    %c0_55 = arith.constant 0 : index
    %c0_56 = arith.constant 0 : index
    %147 = vector.load %arg11[%146, %c0_55, %c0_56] : memref<10x8x96xf32, #tpu.memory_space<vmem>>, vector<1x8x96xf32>
    %148 = vector.shape_cast %147 : vector<1x8x96xf32> to vector<8x96xf32>
    %cst_57 = arith.constant dense<0.000000e+00> : vector<8x96xf32>
    %149 = tpu.matmul %145, %17, %cst_57 {dimension_numbers = #tpu.dot_dimension_numbers<[1], [0], [0], [1], [0, 0, 1, 1], [], []>} : vector<8x32xf32>, vector<32x96xf32>, vector<8x96xf32> -> vector<8x96xf32>
    %150 = vector.extract_strided_slice %148 {offsets = [0, 0], sizes = [8, 64], strides = [1, 1]} : vector<8x96xf32> to vector<8x64xf32>
    %151 = vector.extract_strided_slice %149 {offsets = [0, 0], sizes = [8, 64], strides = [1, 1]} : vector<8x96xf32> to vector<8x64xf32>
    %152 = arith.addf %150, %151 : vector<8x64xf32>
    %cst_58 = arith.constant 5.000000e-01 : f32
    %153 = vector.broadcast %cst_58 : f32 to vector<8x64xf32>
    %154 = arith.mulf %153, %152 : vector<8x64xf32>
    %155 = math.tanh %154 : vector<8x64xf32>
    %cst_59 = arith.constant 5.000000e-01 : f32
    %156 = vector.broadcast %cst_59 : f32 to vector<8x64xf32>
    %157 = arith.mulf %156, %155 : vector<8x64xf32>
    %cst_60 = arith.constant 5.000000e-01 : f32
    %158 = vector.broadcast %cst_60 : f32 to vector<8x64xf32>
    %159 = arith.addf %158, %157 : vector<8x64xf32>
    %160 = vector.extract_strided_slice %159 {offsets = [0, 0], sizes = [8, 32], strides = [1, 1]} : vector<8x64xf32> to vector<8x32xf32>
    %161 = vector.extract_strided_slice %159 {offsets = [0, 32], sizes = [8, 32], strides = [1, 1]} : vector<8x64xf32> to vector<8x32xf32>
    %162 = vector.extract_strided_slice %148 {offsets = [0, 64], sizes = [8, 32], strides = [1, 1]} : vector<8x96xf32> to vector<8x32xf32>
    %163 = vector.extract_strided_slice %149 {offsets = [0, 64], sizes = [8, 32], strides = [1, 1]} : vector<8x96xf32> to vector<8x32xf32>
    %164 = arith.addf %163, %20 : vector<8x32xf32>
    %165 = arith.mulf %160, %164 : vector<8x32xf32>
    %166 = arith.addf %162, %165 : vector<8x32xf32>
    %167 = math.tanh %166 : vector<8x32xf32>
    %168 = arith.index_cast %c4_i32 : i32 to index
    %c0_61 = arith.constant 0 : index
    %c0_62 = arith.constant 0 : index
    %169 = vector.load %arg12[%168, %c0_61, %c0_62] : memref<10x8x32xf32, #tpu.memory_space<vmem>>, vector<1x8x32xf32>
    %170 = vector.shape_cast %169 : vector<1x8x32xf32> to vector<8x32xf32>
    %cst_63 = arith.constant 1.000000e+00 : f32
    %171 = vector.broadcast %cst_63 : f32 to vector<8x32xf32>
    %172 = arith.subf %171, %161 : vector<8x32xf32>
    %173 = arith.mulf %170, %172 : vector<8x32xf32>
    %174 = arith.subf %167, %145 : vector<8x32xf32>
    %175 = arith.mulf %173, %174 : vector<8x32xf32>
    %176 = arith.addf %145, %175 : vector<8x32xf32>
    %c5_i32 = arith.constant 5 : i32
    %177 = arith.index_cast %c5_i32 : i32 to index
    %c0_64 = arith.constant 0 : index
    %c0_65 = arith.constant 0 : index
    %178 = vector.load %arg11[%177, %c0_64, %c0_65] : memref<10x8x96xf32, #tpu.memory_space<vmem>>, vector<1x8x96xf32>
    %179 = vector.shape_cast %178 : vector<1x8x96xf32> to vector<8x96xf32>
    %cst_66 = arith.constant dense<0.000000e+00> : vector<8x96xf32>
    %180 = tpu.matmul %176, %17, %cst_66 {dimension_numbers = #tpu.dot_dimension_numbers<[1], [0], [0], [1], [0, 0, 1, 1], [], []>} : vector<8x32xf32>, vector<32x96xf32>, vector<8x96xf32> -> vector<8x96xf32>
    %181 = vector.extract_strided_slice %179 {offsets = [0, 0], sizes = [8, 64], strides = [1, 1]} : vector<8x96xf32> to vector<8x64xf32>
    %182 = vector.extract_strided_slice %180 {offsets = [0, 0], sizes = [8, 64], strides = [1, 1]} : vector<8x96xf32> to vector<8x64xf32>
    %183 = arith.addf %181, %182 : vector<8x64xf32>
    %cst_67 = arith.constant 5.000000e-01 : f32
    %184 = vector.broadcast %cst_67 : f32 to vector<8x64xf32>
    %185 = arith.mulf %184, %183 : vector<8x64xf32>
    %186 = math.tanh %185 : vector<8x64xf32>
    %cst_68 = arith.constant 5.000000e-01 : f32
    %187 = vector.broadcast %cst_68 : f32 to vector<8x64xf32>
    %188 = arith.mulf %187, %186 : vector<8x64xf32>
    %cst_69 = arith.constant 5.000000e-01 : f32
    %189 = vector.broadcast %cst_69 : f32 to vector<8x64xf32>
    %190 = arith.addf %189, %188 : vector<8x64xf32>
    %191 = vector.extract_strided_slice %190 {offsets = [0, 0], sizes = [8, 32], strides = [1, 1]} : vector<8x64xf32> to vector<8x32xf32>
    %192 = vector.extract_strided_slice %190 {offsets = [0, 32], sizes = [8, 32], strides = [1, 1]} : vector<8x64xf32> to vector<8x32xf32>
    %193 = vector.extract_strided_slice %179 {offsets = [0, 64], sizes = [8, 32], strides = [1, 1]} : vector<8x96xf32> to vector<8x32xf32>
    %194 = vector.extract_strided_slice %180 {offsets = [0, 64], sizes = [8, 32], strides = [1, 1]} : vector<8x96xf32> to vector<8x32xf32>
    %195 = arith.addf %194, %20 : vector<8x32xf32>
    %196 = arith.mulf %191, %195 : vector<8x32xf32>
    %197 = arith.addf %193, %196 : vector<8x32xf32>
    %198 = math.tanh %197 : vector<8x32xf32>
    %199 = arith.index_cast %c5_i32 : i32 to index
    %c0_70 = arith.constant 0 : index
    %c0_71 = arith.constant 0 : index
    %200 = vector.load %arg12[%199, %c0_70, %c0_71] : memref<10x8x32xf32, #tpu.memory_space<vmem>>, vector<1x8x32xf32>
    %201 = vector.shape_cast %200 : vector<1x8x32xf32> to vector<8x32xf32>
    %cst_72 = arith.constant 1.000000e+00 : f32
    %202 = vector.broadcast %cst_72 : f32 to vector<8x32xf32>
    %203 = arith.subf %202, %192 : vector<8x32xf32>
    %204 = arith.mulf %201, %203 : vector<8x32xf32>
    %205 = arith.subf %198, %176 : vector<8x32xf32>
    %206 = arith.mulf %204, %205 : vector<8x32xf32>
    %207 = arith.addf %176, %206 : vector<8x32xf32>
    %c6_i32 = arith.constant 6 : i32
    %208 = arith.index_cast %c6_i32 : i32 to index
    %c0_73 = arith.constant 0 : index
    %c0_74 = arith.constant 0 : index
    %209 = vector.load %arg11[%208, %c0_73, %c0_74] : memref<10x8x96xf32, #tpu.memory_space<vmem>>, vector<1x8x96xf32>
    %210 = vector.shape_cast %209 : vector<1x8x96xf32> to vector<8x96xf32>
    %cst_75 = arith.constant dense<0.000000e+00> : vector<8x96xf32>
    %211 = tpu.matmul %207, %17, %cst_75 {dimension_numbers = #tpu.dot_dimension_numbers<[1], [0], [0], [1], [0, 0, 1, 1], [], []>} : vector<8x32xf32>, vector<32x96xf32>, vector<8x96xf32> -> vector<8x96xf32>
    %212 = vector.extract_strided_slice %210 {offsets = [0, 0], sizes = [8, 64], strides = [1, 1]} : vector<8x96xf32> to vector<8x64xf32>
    %213 = vector.extract_strided_slice %211 {offsets = [0, 0], sizes = [8, 64], strides = [1, 1]} : vector<8x96xf32> to vector<8x64xf32>
    %214 = arith.addf %212, %213 : vector<8x64xf32>
    %cst_76 = arith.constant 5.000000e-01 : f32
    %215 = vector.broadcast %cst_76 : f32 to vector<8x64xf32>
    %216 = arith.mulf %215, %214 : vector<8x64xf32>
    %217 = math.tanh %216 : vector<8x64xf32>
    %cst_77 = arith.constant 5.000000e-01 : f32
    %218 = vector.broadcast %cst_77 : f32 to vector<8x64xf32>
    %219 = arith.mulf %218, %217 : vector<8x64xf32>
    %cst_78 = arith.constant 5.000000e-01 : f32
    %220 = vector.broadcast %cst_78 : f32 to vector<8x64xf32>
    %221 = arith.addf %220, %219 : vector<8x64xf32>
    %222 = vector.extract_strided_slice %221 {offsets = [0, 0], sizes = [8, 32], strides = [1, 1]} : vector<8x64xf32> to vector<8x32xf32>
    %223 = vector.extract_strided_slice %221 {offsets = [0, 32], sizes = [8, 32], strides = [1, 1]} : vector<8x64xf32> to vector<8x32xf32>
    %224 = vector.extract_strided_slice %210 {offsets = [0, 64], sizes = [8, 32], strides = [1, 1]} : vector<8x96xf32> to vector<8x32xf32>
    %225 = vector.extract_strided_slice %211 {offsets = [0, 64], sizes = [8, 32], strides = [1, 1]} : vector<8x96xf32> to vector<8x32xf32>
    %226 = arith.addf %225, %20 : vector<8x32xf32>
    %227 = arith.mulf %222, %226 : vector<8x32xf32>
    %228 = arith.addf %224, %227 : vector<8x32xf32>
    %229 = math.tanh %228 : vector<8x32xf32>
    %230 = arith.index_cast %c6_i32 : i32 to index
    %c0_79 = arith.constant 0 : index
    %c0_80 = arith.constant 0 : index
    %231 = vector.load %arg12[%230, %c0_79, %c0_80] : memref<10x8x32xf32, #tpu.memory_space<vmem>>, vector<1x8x32xf32>
    %232 = vector.shape_cast %231 : vector<1x8x32xf32> to vector<8x32xf32>
    %cst_81 = arith.constant 1.000000e+00 : f32
    %233 = vector.broadcast %cst_81 : f32 to vector<8x32xf32>
    %234 = arith.subf %233, %223 : vector<8x32xf32>
    %235 = arith.mulf %232, %234 : vector<8x32xf32>
    %236 = arith.subf %229, %207 : vector<8x32xf32>
    %237 = arith.mulf %235, %236 : vector<8x32xf32>
    %238 = arith.addf %207, %237 : vector<8x32xf32>
    %c7_i32 = arith.constant 7 : i32
    %239 = arith.index_cast %c7_i32 : i32 to index
    %c0_82 = arith.constant 0 : index
    %c0_83 = arith.constant 0 : index
    %240 = vector.load %arg11[%239, %c0_82, %c0_83] : memref<10x8x96xf32, #tpu.memory_space<vmem>>, vector<1x8x96xf32>
    %241 = vector.shape_cast %240 : vector<1x8x96xf32> to vector<8x96xf32>
    %cst_84 = arith.constant dense<0.000000e+00> : vector<8x96xf32>
    %242 = tpu.matmul %238, %17, %cst_84 {dimension_numbers = #tpu.dot_dimension_numbers<[1], [0], [0], [1], [0, 0, 1, 1], [], []>} : vector<8x32xf32>, vector<32x96xf32>, vector<8x96xf32> -> vector<8x96xf32>
    %243 = vector.extract_strided_slice %241 {offsets = [0, 0], sizes = [8, 64], strides = [1, 1]} : vector<8x96xf32> to vector<8x64xf32>
    %244 = vector.extract_strided_slice %242 {offsets = [0, 0], sizes = [8, 64], strides = [1, 1]} : vector<8x96xf32> to vector<8x64xf32>
    %245 = arith.addf %243, %244 : vector<8x64xf32>
    %cst_85 = arith.constant 5.000000e-01 : f32
    %246 = vector.broadcast %cst_85 : f32 to vector<8x64xf32>
    %247 = arith.mulf %246, %245 : vector<8x64xf32>
    %248 = math.tanh %247 : vector<8x64xf32>
    %cst_86 = arith.constant 5.000000e-01 : f32
    %249 = vector.broadcast %cst_86 : f32 to vector<8x64xf32>
    %250 = arith.mulf %249, %248 : vector<8x64xf32>
    %cst_87 = arith.constant 5.000000e-01 : f32
    %251 = vector.broadcast %cst_87 : f32 to vector<8x64xf32>
    %252 = arith.addf %251, %250 : vector<8x64xf32>
    %253 = vector.extract_strided_slice %252 {offsets = [0, 0], sizes = [8, 32], strides = [1, 1]} : vector<8x64xf32> to vector<8x32xf32>
    %254 = vector.extract_strided_slice %252 {offsets = [0, 32], sizes = [8, 32], strides = [1, 1]} : vector<8x64xf32> to vector<8x32xf32>
    %255 = vector.extract_strided_slice %241 {offsets = [0, 64], sizes = [8, 32], strides = [1, 1]} : vector<8x96xf32> to vector<8x32xf32>
    %256 = vector.extract_strided_slice %242 {offsets = [0, 64], sizes = [8, 32], strides = [1, 1]} : vector<8x96xf32> to vector<8x32xf32>
    %257 = arith.addf %256, %20 : vector<8x32xf32>
    %258 = arith.mulf %253, %257 : vector<8x32xf32>
    %259 = arith.addf %255, %258 : vector<8x32xf32>
    %260 = math.tanh %259 : vector<8x32xf32>
    %261 = arith.index_cast %c7_i32 : i32 to index
    %c0_88 = arith.constant 0 : index
    %c0_89 = arith.constant 0 : index
    %262 = vector.load %arg12[%261, %c0_88, %c0_89] : memref<10x8x32xf32, #tpu.memory_space<vmem>>, vector<1x8x32xf32>
    %263 = vector.shape_cast %262 : vector<1x8x32xf32> to vector<8x32xf32>
    %cst_90 = arith.constant 1.000000e+00 : f32
    %264 = vector.broadcast %cst_90 : f32 to vector<8x32xf32>
    %265 = arith.subf %264, %254 : vector<8x32xf32>
    %266 = arith.mulf %263, %265 : vector<8x32xf32>
    %267 = arith.subf %260, %238 : vector<8x32xf32>
    %268 = arith.mulf %266, %267 : vector<8x32xf32>
    %269 = arith.addf %238, %268 : vector<8x32xf32>
    %c8_i32 = arith.constant 8 : i32
    %270 = arith.index_cast %c8_i32 : i32 to index
    %c0_91 = arith.constant 0 : index
    %c0_92 = arith.constant 0 : index
    %271 = vector.load %arg11[%270, %c0_91, %c0_92] : memref<10x8x96xf32, #tpu.memory_space<vmem>>, vector<1x8x96xf32>
    %272 = vector.shape_cast %271 : vector<1x8x96xf32> to vector<8x96xf32>
    %cst_93 = arith.constant dense<0.000000e+00> : vector<8x96xf32>
    %273 = tpu.matmul %269, %17, %cst_93 {dimension_numbers = #tpu.dot_dimension_numbers<[1], [0], [0], [1], [0, 0, 1, 1], [], []>} : vector<8x32xf32>, vector<32x96xf32>, vector<8x96xf32> -> vector<8x96xf32>
    %274 = vector.extract_strided_slice %272 {offsets = [0, 0], sizes = [8, 64], strides = [1, 1]} : vector<8x96xf32> to vector<8x64xf32>
    %275 = vector.extract_strided_slice %273 {offsets = [0, 0], sizes = [8, 64], strides = [1, 1]} : vector<8x96xf32> to vector<8x64xf32>
    %276 = arith.addf %274, %275 : vector<8x64xf32>
    %cst_94 = arith.constant 5.000000e-01 : f32
    %277 = vector.broadcast %cst_94 : f32 to vector<8x64xf32>
    %278 = arith.mulf %277, %276 : vector<8x64xf32>
    %279 = math.tanh %278 : vector<8x64xf32>
    %cst_95 = arith.constant 5.000000e-01 : f32
    %280 = vector.broadcast %cst_95 : f32 to vector<8x64xf32>
    %281 = arith.mulf %280, %279 : vector<8x64xf32>
    %cst_96 = arith.constant 5.000000e-01 : f32
    %282 = vector.broadcast %cst_96 : f32 to vector<8x64xf32>
    %283 = arith.addf %282, %281 : vector<8x64xf32>
    %284 = vector.extract_strided_slice %283 {offsets = [0, 0], sizes = [8, 32], strides = [1, 1]} : vector<8x64xf32> to vector<8x32xf32>
    %285 = vector.extract_strided_slice %283 {offsets = [0, 32], sizes = [8, 32], strides = [1, 1]} : vector<8x64xf32> to vector<8x32xf32>
    %286 = vector.extract_strided_slice %272 {offsets = [0, 64], sizes = [8, 32], strides = [1, 1]} : vector<8x96xf32> to vector<8x32xf32>
    %287 = vector.extract_strided_slice %273 {offsets = [0, 64], sizes = [8, 32], strides = [1, 1]} : vector<8x96xf32> to vector<8x32xf32>
    %288 = arith.addf %287, %20 : vector<8x32xf32>
    %289 = arith.mulf %284, %288 : vector<8x32xf32>
    %290 = arith.addf %286, %289 : vector<8x32xf32>
    %291 = math.tanh %290 : vector<8x32xf32>
    %292 = arith.index_cast %c8_i32 : i32 to index
    %c0_97 = arith.constant 0 : index
    %c0_98 = arith.constant 0 : index
    %293 = vector.load %arg12[%292, %c0_97, %c0_98] : memref<10x8x32xf32, #tpu.memory_space<vmem>>, vector<1x8x32xf32>
    %294 = vector.shape_cast %293 : vector<1x8x32xf32> to vector<8x32xf32>
    %cst_99 = arith.constant 1.000000e+00 : f32
    %295 = vector.broadcast %cst_99 : f32 to vector<8x32xf32>
    %296 = arith.subf %295, %285 : vector<8x32xf32>
    %297 = arith.mulf %294, %296 : vector<8x32xf32>
    %298 = arith.subf %291, %269 : vector<8x32xf32>
    %299 = arith.mulf %297, %298 : vector<8x32xf32>
    %300 = arith.addf %269, %299 : vector<8x32xf32>
    %c9_i32 = arith.constant 9 : i32
    %301 = arith.index_cast %c9_i32 : i32 to index
    %c0_100 = arith.constant 0 : index
    %c0_101 = arith.constant 0 : index
    %302 = vector.load %arg11[%301, %c0_100, %c0_101] : memref<10x8x96xf32, #tpu.memory_space<vmem>>, vector<1x8x96xf32>
    %303 = vector.shape_cast %302 : vector<1x8x96xf32> to vector<8x96xf32>
    %cst_102 = arith.constant dense<0.000000e+00> : vector<8x96xf32>
    %304 = tpu.matmul %300, %17, %cst_102 {dimension_numbers = #tpu.dot_dimension_numbers<[1], [0], [0], [1], [0, 0, 1, 1], [], []>} : vector<8x32xf32>, vector<32x96xf32>, vector<8x96xf32> -> vector<8x96xf32>
    %305 = vector.extract_strided_slice %303 {offsets = [0, 0], sizes = [8, 64], strides = [1, 1]} : vector<8x96xf32> to vector<8x64xf32>
    %306 = vector.extract_strided_slice %304 {offsets = [0, 0], sizes = [8, 64], strides = [1, 1]} : vector<8x96xf32> to vector<8x64xf32>
    %307 = arith.addf %305, %306 : vector<8x64xf32>
    %cst_103 = arith.constant 5.000000e-01 : f32
    %308 = vector.broadcast %cst_103 : f32 to vector<8x64xf32>
    %309 = arith.mulf %308, %307 : vector<8x64xf32>
    %310 = math.tanh %309 : vector<8x64xf32>
    %cst_104 = arith.constant 5.000000e-01 : f32
    %311 = vector.broadcast %cst_104 : f32 to vector<8x64xf32>
    %312 = arith.mulf %311, %310 : vector<8x64xf32>
    %cst_105 = arith.constant 5.000000e-01 : f32
    %313 = vector.broadcast %cst_105 : f32 to vector<8x64xf32>
    %314 = arith.addf %313, %312 : vector<8x64xf32>
    %315 = vector.extract_strided_slice %314 {offsets = [0, 0], sizes = [8, 32], strides = [1, 1]} : vector<8x64xf32> to vector<8x32xf32>
    %316 = vector.extract_strided_slice %314 {offsets = [0, 32], sizes = [8, 32], strides = [1, 1]} : vector<8x64xf32> to vector<8x32xf32>
    %317 = vector.extract_strided_slice %303 {offsets = [0, 64], sizes = [8, 32], strides = [1, 1]} : vector<8x96xf32> to vector<8x32xf32>
    %318 = vector.extract_strided_slice %304 {offsets = [0, 64], sizes = [8, 32], strides = [1, 1]} : vector<8x96xf32> to vector<8x32xf32>
    %319 = arith.addf %318, %20 : vector<8x32xf32>
    %320 = arith.mulf %315, %319 : vector<8x32xf32>
    %321 = arith.addf %317, %320 : vector<8x32xf32>
    %322 = math.tanh %321 : vector<8x32xf32>
    %323 = arith.index_cast %c9_i32 : i32 to index
    %c0_106 = arith.constant 0 : index
    %c0_107 = arith.constant 0 : index
    %324 = vector.load %arg12[%323, %c0_106, %c0_107] : memref<10x8x32xf32, #tpu.memory_space<vmem>>, vector<1x8x32xf32>
    %325 = vector.shape_cast %324 : vector<1x8x32xf32> to vector<8x32xf32>
    %cst_108 = arith.constant 1.000000e+00 : f32
    %326 = vector.broadcast %cst_108 : f32 to vector<8x32xf32>
    %327 = arith.subf %326, %316 : vector<8x32xf32>
    %328 = arith.mulf %325, %327 : vector<8x32xf32>
    %329 = arith.subf %322, %300 : vector<8x32xf32>
    %330 = arith.mulf %328, %329 : vector<8x32xf32>
    %331 = arith.addf %300, %330 : vector<8x32xf32>
    %c10_i32 = arith.constant 10 : i32
    %c0_109 = arith.constant 0 : index
    %c0_110 = arith.constant 0 : index
    %332 = vector.load %arg6[%c0_109, %c0_110] : memref<32x32xf32, #tpu.memory_space<vmem>>, vector<32x32xf32>
    %cst_111 = arith.constant dense<0.000000e+00> : vector<8x32xf32>
    %333 = tpu.matmul %331, %332, %cst_111 {dimension_numbers = #tpu.dot_dimension_numbers<[1], [0], [0], [1], [0, 0, 1, 1], [], []>} : vector<8x32xf32>, vector<32x32xf32>, vector<8x32xf32> -> vector<8x32xf32>
    %c0_112 = arith.constant 0 : index
    %c0_113 = arith.constant 0 : index
    %334 = vector.load %arg7[%c0_112, %c0_113] : memref<1x32xf32, #tpu.memory_space<vmem>>, vector<1x32xf32>
    %335 = vector.broadcast %334 : vector<1x32xf32> to vector<8x32xf32>
    %336 = arith.addf %333, %335 : vector<8x32xf32>
    %c0_114 = arith.constant 0 : index
    %c0_115 = arith.constant 0 : index
    %337 = vector.load %arg8[%c0_114, %c0_115] : memref<6x8xf32, #tpu.memory_space<vmem>>, vector<6x8xf32>
    %cst_116 = arith.constant dense<0.000000e+00> : vector<6x32xf32>
    %338 = tpu.matmul %337, %336, %cst_116 {dimension_numbers = #tpu.dot_dimension_numbers<[1], [0], [0], [1], [0, 0, 1, 1], [], []>} : vector<6x8xf32>, vector<8x32xf32>, vector<6x32xf32> -> vector<6x32xf32>
    %c0_117 = arith.constant 0 : index
    %c0_118 = arith.constant 0 : index
    %339 = vector.load %arg9[%c0_117, %c0_118] : memref<6x8xf32, #tpu.memory_space<vmem>>, vector<6x8xf32>
    %cst_119 = arith.constant dense<0.000000e+00> : vector<6x32xf32>
    %340 = tpu.matmul %339, %331, %cst_119 {dimension_numbers = #tpu.dot_dimension_numbers<[1], [0], [0], [1], [0, 0, 1, 1], [], []>} : vector<6x8xf32>, vector<8x32xf32>, vector<6x32xf32> -> vector<6x32xf32>
    %341 = arith.mulf %338, %340 : vector<6x32xf32>
    %cst_120 = arith.constant dense<0.000000e+00> : vector<6xf32>
    %342 = vector.multi_reduction <add>, %341, %cst_120 [1] : vector<6x32xf32> to vector<6xf32>
    %343 = vector.shape_cast %342 : vector<6xf32> to vector<6x1xf32>
    %cst_121 = arith.constant 5.000000e-01 : f32
    %344 = vector.broadcast %cst_121 : f32 to vector<6x1xf32>
    %345 = arith.mulf %344, %343 : vector<6x1xf32>
    %346 = math.tanh %345 : vector<6x1xf32>
    %cst_122 = arith.constant 5.000000e-01 : f32
    %347 = vector.broadcast %cst_122 : f32 to vector<6x1xf32>
    %348 = arith.mulf %347, %346 : vector<6x1xf32>
    %cst_123 = arith.constant 5.000000e-01 : f32
    %349 = vector.broadcast %cst_123 : f32 to vector<6x1xf32>
    %350 = arith.addf %349, %348 : vector<6x1xf32>
    %c0_124 = arith.constant 0 : index
    %c0_125 = arith.constant 0 : index
    %351 = vector.load %arg10[%c0_124, %c0_125] : memref<6x1xf32, #tpu.memory_space<vmem>>, vector<6x1xf32>
    tpu.vector_store %arg10[%c0_124, %c0_125], %350 {strides = array<i32>} : memref<6x1xf32, #tpu.memory_space<vmem>>, vector<6x1xf32>,
    return
  }
}

</mosaic_0001>

<llo_original>
// kernel: tpu_custom_call.1
$region0: #{tpu_custom_call.1}
  #allocation0 [shape = 'u32[]', space=smem, size = 0x4, offset = 0x4, fixed_abs, tag = 'smem constant byte address 0x4 - core index']
  #allocation1 [shape = 'u32[144,128]{1,0:T(1,128)}', space=vmem, size = 0x12000, scoped, tag = 'internal scratch']
  #allocation2 [shape = 'f32[10,8,96]{2,1,0:T(8,128)}', space=vmem, size = 0xa000, scoped, tag = 'scratch operand']
  #allocation3 [shape = 'f32[10,8,32]{2,1,0:T(8,128)}', space=vmem, size = 0xa000, scoped, tag = 'scratch operand']
  %s0 = inlined_call_operand.vmem [shape: s32[8,1], index: 0, kind: input, shape index: {}]
  %s1 = inlined_call_operand.hbm [shape: f32[10,8,16], index: 1, kind: input, shape index: {}]
  %s2 = inlined_call_operand.vmem [shape: f32[16,96], index: 2, kind: input, shape index: {}]
  %s3 = inlined_call_operand.hbm [shape: f32[32,96], index: 3, kind: input, shape index: {}]
  %s4 = inlined_call_operand.hbm [shape: f32[1,96], index: 4, kind: input, shape index: {}]
  %s5 = inlined_call_operand.vmem [shape: f32[1,32], index: 5, kind: input, shape index: {}]
  %s6 = inlined_call_operand.hbm [shape: f32[32,32], index: 6, kind: input, shape index: {}]
  %s7 = inlined_call_operand.vmem [shape: f32[1,32], index: 7, kind: input, shape index: {}]
  %s8 = inlined_call_operand.vmem [shape: f32[6,8], index: 8, kind: input, shape index: {}]
  %s9 = inlined_call_operand.vmem [shape: f32[6,8], index: 9, kind: input, shape index: {}]
  %s10 = inlined_call_operand.vmem [shape: f32[6,1], index: 10, kind: output, shape index: {}]
  %s11 = sld [smem:[#allocation0]]
  $region66: #{tpu_custom_call.1} parent=0
    _
  %s13 = ssub.s32 1, %s11
  %s14 = scalar_select 0, %s13, %s11
  $region1: #{tpu_custom_call.1} parent=0
    #allocation4 [shape = 'u8[40960]{0}', space=vmem, size = 0xa000, scoped, tag = 'input window, operand 1, single buffered']
    #allocation5 [shape = 's32[1]{0}', space=sflag, size = 0x4, scoped, tag = 'scoped memory for tpu_custom_call.1']
    #allocation6 [shape = 'u8[16384]{0}', space=vmem, size = 0x4000, scoped, tag = 'input window, operand 3, single buffered']
    #allocation7 [shape = 's32[1]{0}', space=sflag, size = 0x4, scoped, tag = 'scoped memory for tpu_custom_call.1']
    #allocation8 [shape = 'u8[512]{0}', space=vmem, size = 0x400, scoped, tag = 'input window, operand 4, single buffered']
    #allocation9 [shape = 'u8[16384]{0}', space=vmem, size = 0x4000, scoped, tag = 'input window, operand 6, single buffered']
    #allocation10 [shape = 's32[1]{0}', space=sflag, size = 0x4, scoped, tag = 'scoped memory for tpu_custom_call.1']
    %15 = vsyncpa [#allocation5], 0
    %16 = vsyncpa [#allocation7], 0
    %17 = vsyncpa [#allocation10], 0
    // Predicated region
    $region2: #{tpu_custom_call.1} parent=1 // pred_check
      _
    $region3: #{tpu_custom_call.1} parent=1 // pred_check_branch
      %19 = sbr.rel (0) target = $region5
    $region4: #{tpu_custom_call.1} parent=1 // pred_region
      _
    $region5: #{tpu_custom_call.1} parent=1 // pred_fallthru
      _
    // Predicated region
    $region6: #{tpu_custom_call.1} parent=1 // pred_check
      _
    $region7: #{tpu_custom_call.1} parent=1 // pred_check_branch
      %21 = sbr.rel (0) target = $region9
    $region8: #{tpu_custom_call.1} parent=1 // pred_region
      %s23 = ssub.s32 1280, 1280
      %24 = vsyncadd [#allocation5], %s23
      %s25 = sshll.u32 [#allocation4], 4
      %s26 = int_to_ptr.vmem [resolvable:$true] %s25
      %31 = dma.hbm_to_vmem [thread:$0]  %s1, 1280, %s26, [#allocation5], 128, 128, 8
    $region9: #{tpu_custom_call.1} parent=1 // pred_fallthru
      _
    // Predicated region
    $region10: #{tpu_custom_call.1} parent=1 // pred_check
      _
    $region11: #{tpu_custom_call.1} parent=1 // pred_check_branch
      %33 = sbr.rel (0) target = $region13
    $region12: #{tpu_custom_call.1} parent=1 // pred_region
      _
    $region13: #{tpu_custom_call.1} parent=1 // pred_fallthru
      _
    // Predicated region
    $region14: #{tpu_custom_call.1} parent=1 // pred_check
      _
    $region15: #{tpu_custom_call.1} parent=1 // pred_check_branch
      %35 = sbr.rel (0) target = $region17
    $region16: #{tpu_custom_call.1} parent=1 // pred_region
      %s37 = ssub.s32 512, 512
      %38 = vsyncadd [#allocation7], %s37
      %s39 = sshll.u32 [#allocation6], 4
      %s40 = int_to_ptr.vmem [resolvable:$true] %s39
      %45 = dma.hbm_to_vmem [thread:$0]  %s3, 512, %s40, [#allocation7], 128, 128, 8
    $region17: #{tpu_custom_call.1} parent=1 // pred_fallthru
      _
    // Predicated region
    $region18: #{tpu_custom_call.1} parent=1 // pred_check
      _
    $region19: #{tpu_custom_call.1} parent=1 // pred_check_branch
      %47 = sbr.rel (0) target = $region21
    $region20: #{tpu_custom_call.1} parent=1 // pred_region
      %s49 = ssub.s32 16, 16
      %50 = vsyncadd [#allocation7], %s49
      %s52 = sshll.u32 [#allocation8], 4
      %s53 = int_to_ptr.vmem [resolvable:$true] %s52
      %55 = dma.hbm_to_vmem [thread:$0]  %s4, 16, %s53, [#allocation7]
    $region21: #{tpu_custom_call.1} parent=1 // pred_fallthru
      _
    // Predicated region
    $region22: #{tpu_custom_call.1} parent=1 // pred_check
      _
    $region23: #{tpu_custom_call.1} parent=1 // pred_check_branch
      %57 = sbr.rel (0) target = $region25
    $region24: #{tpu_custom_call.1} parent=1 // pred_region
      _
    $region25: #{tpu_custom_call.1} parent=1 // pred_fallthru
      _
    // Predicated region
    $region26: #{tpu_custom_call.1} parent=1 // pred_check
      _
    $region27: #{tpu_custom_call.1} parent=1 // pred_check_branch
      %59 = sbr.rel (0) target = $region29
    $region28: #{tpu_custom_call.1} parent=1 // pred_region
      %s61 = ssub.s32 512, 512
      %62 = vsyncadd [#allocation10], %s61
      %s63 = sshll.u32 [#allocation9], 4
      %s64 = int_to_ptr.vmem [resolvable:$true] %s63
      %69 = dma.hbm_to_vmem [thread:$0]  %s6, 512, %s64, [#allocation10], 128, 128, 8
    $region29: #{tpu_custom_call.1} parent=1 // pred_fallthru
      _
    // Predicated region
    $region30: #{tpu_custom_call.1} parent=1 // pred_check
      _
    $region31: #{tpu_custom_call.1} parent=1 // pred_check_branch
      %71 = sbr.rel (0) target = $region33
    $region32: #{tpu_custom_call.1} parent=1 // pred_region
      _
    $region33: #{tpu_custom_call.1} parent=1 // pred_fallthru
      _
    // Predicated region
    $region34: #{tpu_custom_call.1} parent=1 // pred_check
      _
    $region35: #{tpu_custom_call.1} parent=1 // pred_check_branch
      %73 = sbr.rel (0) target = $region37
    $region36: #{tpu_custom_call.1} parent=1 // pred_region
      _
    $region37: #{tpu_custom_call.1} parent=1 // pred_fallthru
      _
    // Predicated region
    $region38: #{tpu_custom_call.1} parent=1 // pred_check
      _
    $region39: #{tpu_custom_call.1} parent=1 // pred_check_branch
      %75 = sbr.rel (0) target = $region41
    $region40: #{tpu_custom_call.1} parent=1 // pred_region
      _
    $region41: #{tpu_custom_call.1} parent=1 // pred_fallthru
      _
    // Predicated region
    $region42: #{tpu_custom_call.1} parent=1 // pred_check
      _
    $region43: #{tpu_custom_call.1} parent=1 // pred_check_branch
      %77 = sbr.rel (0) target = $region45
    $region44: #{tpu_custom_call.1} parent=1 // pred_region
      %78 = dma.done [#allocation5], 1280
    $region45: #{tpu_custom_call.1} parent=1 // pred_fallthru
      _
    // Predicated region
    $region46: #{tpu_custom_call.1} parent=1 // pred_check
      _
    $region47: #{tpu_custom_call.1} parent=1 // pred_check_branch
      %80 = sbr.rel (0) target = $region49
    $region48: #{tpu_custom_call.1} parent=1 // pred_region
      %81 = dma.done [#allocation7], 512
    $region49: #{tpu_custom_call.1} parent=1 // pred_fallthru
      _
    // Predicated region
    $region50: #{tpu_custom_call.1} parent=1 // pred_check
      _
    $region51: #{tpu_custom_call.1} parent=1 // pred_check_branch
      %83 = sbr.rel (0) target = $region53
    $region52: #{tpu_custom_call.1} parent=1 // pred_region
      %84 = dma.done [#allocation7], 16
    $region53: #{tpu_custom_call.1} parent=1 // pred_fallthru
      _
    // Predicated region
    $region54: #{tpu_custom_call.1} parent=1 // pred_check
      _
    $region55: #{tpu_custom_call.1} parent=1 // pred_check_branch
      %86 = sbr.rel (0) target = $region57
    $region56: #{tpu_custom_call.1} parent=1 // pred_region
      %87 = dma.done [#allocation10], 512
    $region57: #{tpu_custom_call.1} parent=1 // pred_fallthru
      _
    %v88 = vld [vmem:[#allocation4] sm:$0xff]
    %v89 = vld [vmem:[#allocation4 + $0x8] sm:$0xff]
    %v90 = vld [vmem:[#allocation4 + $0x10] sm:$0xff]
    %v91 = vld [vmem:[#allocation4 + $0x18] sm:$0xff]
    %v92 = vld [vmem:[#allocation4 + $0x20] sm:$0xff]
    %v93 = vld [vmem:[#allocation4 + $0x28] sm:$0xff]
    %v94 = vld [vmem:[#allocation4 + $0x30] sm:$0xff]
    %v95 = vld [vmem:[#allocation4 + $0x38] sm:$0xff]
    %v96 = vld [vmem:[#allocation4 + $0x40] sm:$0xff]
    %v97 = vld [vmem:[#allocation4 + $0x48] sm:$0xff]
    %v98 = vld [vmem:[%s2] sm:$0xff]
    %v99 = vld [vmem:[%s2 + $0x8] sm:$0xff]
    %v100 = vld [vmem:[#allocation8] sm:$0x1]
    %v102 = vlaneseq
    %v103 = vshrl.u32 %v102, 7
    %v104 = vsub.s32 0, %v103
    %v105 = vrot.slane %v100, %v104
    %vm107 = vcmask 130048
    %v109 = vsel %vm107, %v88, 0
    %v112 = vsel %vm107, %v89, 0
    %v115 = vsel %vm107, %v90, 0
    %v118 = vsel %vm107, %v91, 0
    %v121 = vsel %vm107, %v92, 0
    %v124 = vsel %vm107, %v93, 0
    %v127 = vsel %vm107, %v94, 0
    %v130 = vsel %vm107, %v95, 0
    %v133 = vsel %vm107, %v96, 0
    %v136 = vsel %vm107, %v97, 0
    %138 = vmatprep.subr.mxu0 0.0
    %139 = vmatpush1.msra.mxu0 %v98
    %140 = vmatprep.subr.mxu0 0.0
    %141 = vmatpush1.msra.mxu0 %v99
    %142 = vmatprep.subr.mxu0 0.0
    %143 = vmatpush1.msra.mxu0 0.0
    %144 = vmatprep.subr.mxu0 0.0
    %145 = vmatpush1.msra.mxu0 0.0
    %146 = vmatprep.subr.mxu0 0.0
    %147 = vmatpush1.msra.mxu0 0.0
    %148 = vmatprep.subr.mxu0 0.0
    %149 = vmatpush1.msra.mxu0 0.0
    %150 = vmatprep.subr.mxu0 0.0
    %151 = vmatpush1.msra.mxu0 0.0
    %152 = vmatprep.subr.mxu0 0.0
    %153 = vmatpush1.msra.mxu0 0.0
    %154 = vmatprep.subr.mxu0 0.0
    %155 = vmatpush1.msra.mxu0 0.0
    %156 = vmatprep.subr.mxu0 0.0
    %157 = vmatpush1.msra.mxu0 0.0
    %158 = vmatprep.subr.mxu0 0.0
    %159 = vmatpush1.msra.mxu0 0.0
    %160 = vmatprep.subr.mxu0 0.0
    %161 = vmatpush1.msra.mxu0 0.0
    %162 = vmatprep.subr.mxu0 0.0
    %163 = vmatpush1.msra.mxu0 0.0
    %164 = vmatprep.subr.mxu0 0.0
    %165 = vmatpush1.msra.mxu0 0.0
    %166 = vmatprep.subr.mxu0 0.0
    %167 = vmatpush1.msra.mxu0 0.0
    %168 = vmatprep.subr.mxu0 0.0
    %169 = vmatpush1.msra.mxu0 0.0
    %170 = vmatprep.subr.mxu0 0.0
    %171 = vmatpush1.msra.mxu0 0.0
    %172 = vmatprep.subr.mxu0 0.0
    %173 = vmatpush1.msra.mxu0 0.0
    %174 = vmatprep.subr.mxu0 0.0
    %175 = vmatpush1.msra.mxu0 0.0
    %176 = vmatprep.subr.mxu0 0.0
    %177 = vmatpush1.msra.mxu0 0.0
    %178 = vmatprep.subr.mxu0 0.0
    %179 = vmatpush1.msra.mxu0 0.0
    %180 = vmatprep.subr.mxu0 0.0
    %181 = vmatpush1.msra.mxu0 0.0
    %182 = vmatprep.subr.mxu0 0.0
    %183 = vmatpush1.msra.mxu0 0.0
    %184 = vmatprep.subr.mxu0 0.0
    %185 = vmatpush1.msra.mxu0 0.0
    %186 = vmatprep.subr.mxu0 0.0
    %187 = vmatpush1.msra.mxu0 0.0
    %188 = vmatprep.subr.mxu0 0.0
    %189 = vmatpush1.msra.mxu0 0.0
    %190 = vmatprep.subr.mxu0 0.0
    %191 = vmatpush1.msra.mxu0 0.0
    %192 = vmatprep.subr.mxu0 0.0
    %193 = vmatpush1.msra.mxu0 0.0
    %194 = vmatprep.subr.mxu0 0.0
    %195 = vmatpush1.msra.mxu0 0.0
    %196 = vmatprep.subr.mxu0 0.0
    %197 = vmatpush1.msra.mxu0 0.0
    %198 = vmatprep.subr.mxu0 0.0
    %199 = vmatpush1.msra.mxu0 0.0
    %200 = vmatprep.subr.mxu0 0.0
    %201 = vmatpush1.msra.mxu0 0.0
    %202 = vmatprep.mubr.f32.mxu0 0.0
    %203 = vmatmul.mubr.f32.gmra.mrb[0].mxu0 %v109
    %v204 = vpop.f32.mrb[0].mxu0
    %v205 = vadd.f32 %v105, %v204
    %v206 = vpop.f32.mrb[0].mxu0
    %207 = vmatprep.mubr.f32.mxu0 0.0
    %208 = vmatmul.mubr.f32.gmra.mrb[0].mxu0 %v112
    %v209 = vpop.f32.mrb[0].mxu0
    %v210 = vadd.f32 %v105, %v209
    %v211 = vpop.f32.mrb[0].mxu0
    %212 = vmatprep.mubr.f32.mxu0 0.0
    %213 = vmatmul.mubr.f32.gmra.mrb[0].mxu0 %v115
    %v214 = vpop.f32.mrb[0].mxu0
    %v215 = vadd.f32 %v105, %v214
    %v216 = vpop.f32.mrb[0].mxu0
    %217 = vmatprep.mubr.f32.mxu0 0.0
    %218 = vmatmul.mubr.f32.gmra.mrb[0].mxu0 %v118
    %v219 = vpop.f32.mrb[0].mxu0
    %v220 = vadd.f32 %v105, %v219
    %v221 = vpop.f32.mrb[0].mxu0
    %222 = vmatprep.mubr.f32.mxu0 0.0
    %223 = vmatmul.mubr.f32.gmra.mrb[0].mxu0 %v121
    %v224 = vpop.f32.mrb[0].mxu0
    %v225 = vadd.f32 %v105, %v224
    %v226 = vpop.f32.mrb[0].mxu0
    %227 = vmatprep.mubr.f32.mxu0 0.0
    %228 = vmatmul.mubr.f32.gmra.mrb[0].mxu0 %v124
    %v229 = vpop.f32.mrb[0].mxu0
    %v230 = vadd.f32 %v105, %v229
    %v231 = vpop.f32.mrb[0].mxu0
    %232 = vmatprep.mubr.f32.mxu0 0.0
    %233 = vmatmul.mubr.f32.gmra.mrb[0].mxu0 %v127
    %v234 = vpop.f32.mrb[0].mxu0
    %v235 = vadd.f32 %v105, %v234
    %v236 = vpop.f32.mrb[0].mxu0
    %237 = vmatprep.mubr.f32.mxu0 0.0
    %238 = vmatmul.mubr.f32.gmra.mrb[0].mxu0 %v130
    %v239 = vpop.f32.mrb[0].mxu0
    %v240 = vadd.f32 %v105, %v239
    %v241 = vpop.f32.mrb[0].mxu0
    %242 = vmatprep.mubr.f32.mxu0 0.0
    %243 = vmatmul.mubr.f32.gmra.mrb[0].mxu0 %v133
    %v244 = vpop.f32.mrb[0].mxu0
    %v245 = vadd.f32 %v105, %v244
    %v246 = vpop.f32.mrb[0].mxu0
    %247 = vmatprep.mubr.f32.mxu0 0.0
    %248 = vmatmul.mubr.f32.gmra.mrb[0].mxu0 %v136
    %v249 = vpop.f32.mrb[0].mxu0
    %v250 = vadd.f32 %v105, %v249
    %v251 = vpop.f32.mrb[0].mxu0
    %252 = vdwg.mxu0
    %vm253 = vcmask 785408
    %254 = vst.msk [vmem:[#allocation2] sm:$0xff] %vm253, %v205
    %255 = vst.msk [vmem:[#allocation2 + $0x8] sm:$0xff] %vm253, %v210
    %256 = vst.msk [vmem:[#allocation2 + $0x10] sm:$0xff] %vm253, %v215
    %257 = vst.msk [vmem:[#allocation2 + $0x18] sm:$0xff] %vm253, %v220
    %258 = vst.msk [vmem:[#allocation2 + $0x20] sm:$0xff] %vm253, %v225
    %259 = vst.msk [vmem:[#allocation2 + $0x28] sm:$0xff] %vm253, %v230
    %260 = vst.msk [vmem:[#allocation2 + $0x30] sm:$0xff] %vm253, %v235
    %261 = vst.msk [vmem:[#allocation2 + $0x38] sm:$0xff] %vm253, %v240
    %262 = vst.msk [vmem:[#allocation2 + $0x40] sm:$0xff] %vm253, %v245
    %263 = vst.msk [vmem:[#allocation2 + $0x48] sm:$0xff] %vm253, %v250
    %v264 = vld [vmem:[%s0] sm:$0xff]
    %265 = vset.pattern.permute.xlu0 0
    %266 = vperm.xlu0 %265, %v264
    %v267 = vpop.permute.xlu0 %266
    %vm268 = vcmp.gt.s32.totalorder %v267, 0
    %vm269 = vcmp.gt.s32.totalorder %v267, 1
    %vm270 = vcmp.gt.s32.totalorder %v267, 2
    %vm271 = vcmp.gt.s32.totalorder %v267, 3
    %vm272 = vcmp.gt.s32.totalorder %v267, 4
    %vm273 = vcmp.gt.s32.totalorder %v267, 5
    %vm274 = vcmp.gt.s32.totalorder %v267, 6
    %vm275 = vcmp.gt.s32.totalorder %v267, 7
    %vm276 = vcmp.gt.s32.totalorder %v267, 8
    %vm277 = vcmp.gt.s32.totalorder %v267, 9
    %v278 = vsel %vm268, 1, 0
    %v279 = vsel %vm269, 1, 0
    %v280 = vsel %vm270, 1, 0
    %v281 = vsel %vm271, 1, 0
    %v282 = vsel %vm272, 1, 0
    %v283 = vsel %vm273, 1, 0
    %v284 = vsel %vm274, 1, 0
    %v285 = vsel %vm275, 1, 0
    %v286 = vsel %vm276, 1, 0
    %v287 = vsel %vm277, 1, 0
    %v288 = vcvt.s32.f32 %v278
    %v289 = vcvt.s32.f32 %v279
    %v290 = vcvt.s32.f32 %v280
    %v291 = vcvt.s32.f32 %v281
    %v292 = vcvt.s32.f32 %v282
    %v293 = vcvt.s32.f32 %v283
    %v294 = vcvt.s32.f32 %v284
    %v295 = vcvt.s32.f32 %v285
    %v296 = vcvt.s32.f32 %v286
    %v297 = vcvt.s32.f32 %v287
    %vm298 = vcmask 261120
    %299 = vst.msk [vmem:[#allocation3] sm:$0xff] %vm298, %v288
    %300 = vst.msk [vmem:[#allocation3 + $0x8] sm:$0xff] %vm298, %v289
    %301 = vst.msk [vmem:[#allocation3 + $0x10] sm:$0xff] %vm298, %v290
    %302 = vst.msk [vmem:[#allocation3 + $0x18] sm:$0xff] %vm298, %v291
    %303 = vst.msk [vmem:[#allocation3 + $0x20] sm:$0xff] %vm298, %v292
    %304 = vst.msk [vmem:[#allocation3 + $0x28] sm:$0xff] %vm298, %v293
    %305 = vst.msk [vmem:[#allocation3 + $0x30] sm:$0xff] %vm298, %v294
    %306 = vst.msk [vmem:[#allocation3 + $0x38] sm:$0xff] %vm298, %v295
    %307 = vst.msk [vmem:[#allocation3 + $0x40] sm:$0xff] %vm298, %v296
    %308 = vst.msk [vmem:[#allocation3 + $0x48] sm:$0xff] %vm298, %v297
    %v309 = vld [vmem:[#allocation6] sm:$0xff]
    %v310 = vld [vmem:[#allocation6 + $0x8] sm:$0xff]
    %v311 = vld [vmem:[#allocation6 + $0x10] sm:$0xff]
    %v312 = vld [vmem:[#allocation6 + $0x18] sm:$0xff]
    %v313 = vld [vmem:[%s5] sm:$0x1]
    %v315 = vlaneseq
    %v316 = vshrl.u32 %v315, 7
    %v317 = vsub.s32 0, %v316
    %v318 = vrot.slane %v313, %v317
    %v319 = vld [vmem:[#allocation2] sm:$0xff]
    %v321 = vsel %vm298, 0.0, 0
    %323 = vmatprep.subr.mxu0 0.0
    %324 = vmatpush1.msra.mxu0 %v309
    %325 = vmatprep.subr.mxu0 0.0
    %326 = vmatpush1.msra.mxu0 %v310
    %327 = vmatprep.subr.mxu0 0.0
    %328 = vmatpush1.msra.mxu0 %v311
    %329 = vmatprep.subr.mxu0 0.0
    %330 = vmatpush1.msra.mxu0 %v312
    %331 = vmatprep.subr.mxu0 0.0
    %332 = vmatpush1.msra.mxu0 0.0
    %333 = vmatprep.subr.mxu0 0.0
    %334 = vmatpush1.msra.mxu0 0.0
    %335 = vmatprep.subr.mxu0 0.0
    %336 = vmatpush1.msra.mxu0 0.0
    %337 = vmatprep.subr.mxu0 0.0
    %338 = vmatpush1.msra.mxu0 0.0
    %339 = vmatprep.subr.mxu0 0.0
    %340 = vmatpush1.msra.mxu0 0.0
    %341 = vmatprep.subr.mxu0 0.0
    %342 = vmatpush1.msra.mxu0 0.0
    %343 = vmatprep.subr.mxu0 0.0
    %344 = vmatpush1.msra.mxu0 0.0
    %345 = vmatprep.subr.mxu0 0.0
    %346 = vmatpush1.msra.mxu0 0.0
    %347 = vmatprep.subr.mxu0 0.0
    %348 = vmatpush1.msra.mxu0 0.0
    %349 = vmatprep.subr.mxu0 0.0
    %350 = vmatpush1.msra.mxu0 0.0
    %351 = vmatprep.subr.mxu0 0.0
    %352 = vmatpush1.msra.mxu0 0.0
    %353 = vmatprep.subr.mxu0 0.0
    %354 = vmatpush1.msra.mxu0 0.0
    %355 = vmatprep.subr.mxu0 0.0
    %356 = vmatpush1.msra.mxu0 0.0
    %357 = vmatprep.subr.mxu0 0.0
    %358 = vmatpush1.msra.mxu0 0.0
    %359 = vmatprep.subr.mxu0 0.0
    %360 = vmatpush1.msra.mxu0 0.0
    %361 = vmatprep.subr.mxu0 0.0
    %362 = vmatpush1.msra.mxu0 0.0
    %363 = vmatprep.subr.mxu0 0.0
    %364 = vmatpush1.msra.mxu0 0.0
    %365 = vmatprep.subr.mxu0 0.0
    %366 = vmatpush1.msra.mxu0 0.0
    %367 = vmatprep.subr.mxu0 0.0
    %368 = vmatpush1.msra.mxu0 0.0
    %369 = vmatprep.subr.mxu0 0.0
    %370 = vmatpush1.msra.mxu0 0.0
    %371 = vmatprep.subr.mxu0 0.0
    %372 = vmatpush1.msra.mxu0 0.0
    %373 = vmatprep.subr.mxu0 0.0
    %374 = vmatpush1.msra.mxu0 0.0
    %375 = vmatprep.subr.mxu0 0.0
    %376 = vmatpush1.msra.mxu0 0.0
    %377 = vmatprep.subr.mxu0 0.0
    %378 = vmatpush1.msra.mxu0 0.0
    %379 = vmatprep.subr.mxu0 0.0
    %380 = vmatpush1.msra.mxu0 0.0
    %381 = vmatprep.subr.mxu0 0.0
    %382 = vmatpush1.msra.mxu0 0.0
    %383 = vmatprep.subr.mxu0 0.0
    %384 = vmatpush1.msra.mxu0 0.0
    %385 = vmatprep.subr.mxu0 0.0
    %386 = vmatpush1.msra.mxu0 0.0
    %387 = vmatprep.mubr.f32.mxu0 0.0
    %388 = vmatmul.mubr.f32.gmra.mrb[0].mxu0 %v321
    %v389 = vpop.f32.mrb[0].mxu0
    %v390 = vadd.f32 0.0, %v389
    %v391 = vpop.f32.mrb[0].mxu0
    %392 = vdwg.mxu0
    %v393 = vadd.f32 %v319, %v390
    %v394 = vmul.f32 %v393, 0.5
    %v395 = vtanh.pop %v394
    %v396 = vmul.f32 %v395, 0.5
    %v397 = vadd.f32 %v396, 0.5
    %398 = vrot.lane.b32.xlu0 %v318, 64
    %v399 = vpop.permute.xlu0 %398
    %v401 = vadd.f32 %v390, %v399
    %403 = vrot.lane.b32.xlu0 %v401, 64
    %v404 = vpop.permute.xlu0 %403
    %v406 = vmul.f32 %v397, %v404
    %408 = vrot.lane.b32.xlu0 %v406, 64
    %v409 = vpop.permute.xlu0 %408
    %v411 = vadd.f32 %v319, %v409
    %v412 = vtanh.pop %v411
    %v413 = vld [vmem:[#allocation3] sm:$0xff]
    %v414 = vsub.f32 1.0, %v397
    %416 = vrot.lane.b32.xlu0 %v414, 96
    %v417 = vpop.permute.xlu0 %416
    %v419 = vmul.f32 %v413, %v417
    %421 = vrot.lane.b32.xlu0 %v412, 64
    %v422 = vpop.permute.xlu0 %421
    %v424 = vmul.f32 %v419, %v422
    %v425 = vadd.f32 %v424, 0.0
    %s426 = scalar_lea.vmem [#allocation2], 8
    %v427 = vld [vmem:[%s426] sm:$0xff]
    %v429 = vsel %vm298, %v425, 0
    %431 = vmatprep.subr.mxu0 0.0
    %432 = vmatpush1.msra.mxu0 %v309
    %433 = vmatprep.subr.mxu0 0.0
    %434 = vmatpush1.msra.mxu0 %v310
    %435 = vmatprep.subr.mxu0 0.0
    %436 = vmatpush1.msra.mxu0 %v311
    %437 = vmatprep.subr.mxu0 0.0
    %438 = vmatpush1.msra.mxu0 %v312
    %439 = vmatprep.subr.mxu0 0.0
    %440 = vmatpush1.msra.mxu0 0.0
    %441 = vmatprep.subr.mxu0 0.0
    %442 = vmatpush1.msra.mxu0 0.0
    %443 = vmatprep.subr.mxu0 0.0
    %444 = vmatpush1.msra.mxu0 0.0
    %445 = vmatprep.subr.mxu0 0.0
    %446 = vmatpush1.msra.mxu0 0.0
    %447 = vmatprep.subr.mxu0 0.0
    %448 = vmatpush1.msra.mxu0 0.0
    %449 = vmatprep.subr.mxu0 0.0
    %450 = vmatpush1.msra.mxu0 0.0
    %451 = vmatprep.subr.mxu0 0.0
    %452 = vmatpush1.msra.mxu0 0.0
    %453 = vmatprep.subr.mxu0 0.0
    %454 = vmatpush1.msra.mxu0 0.0
    %455 = vmatprep.subr.mxu0 0.0
    %456 = vmatpush1.msra.mxu0 0.0
    %457 = vmatprep.subr.mxu0 0.0
    %458 = vmatpush1.msra.mxu0 0.0
    %459 = vmatprep.subr.mxu0 0.0
    %460 = vmatpush1.msra.mxu0 0.0
    %461 = vmatprep.subr.mxu0 0.0
    %462 = vmatpush1.msra.mxu0 0.0
    %463 = vmatprep.subr.mxu0 0.0
    %464 = vmatpush1.msra.mxu0 0.0
    %465 = vmatprep.subr.mxu0 0.0
    %466 = vmatpush1.msra.mxu0 0.0
    %467 = vmatprep.subr.mxu0 0.0
    %468 = vmatpush1.msra.mxu0 0.0
    %469 = vmatprep.subr.mxu0 0.0
    %470 = vmatpush1.msra.mxu0 0.0
    %471 = vmatprep.subr.mxu0 0.0
    %472 = vmatpush1.msra.mxu0 0.0
    %473 = vmatprep.subr.mxu0 0.0
    %474 = vmatpush1.msra.mxu0 0.0
    %475 = vmatprep.subr.mxu0 0.0
    %476 = vmatpush1.msra.mxu0 0.0
    %477 = vmatprep.subr.mxu0 0.0
    %478 = vmatpush1.msra.mxu0 0.0
    %479 = vmatprep.subr.mxu0 0.0
    %480 = vmatpush1.msra.mxu0 0.0
    %481 = vmatprep.subr.mxu0 0.0
    %482 = vmatpush1.msra.mxu0 0.0
    %483 = vmatprep.subr.mxu0 0.0
    %484 = vmatpush1.msra.mxu0 0.0
    %485 = vmatprep.subr.mxu0 0.0
    %486 = vmatpush1.msra.mxu0 0.0
    %487 = vmatprep.subr.mxu0 0.0
    %488 = vmatpush1.msra.mxu0 0.0
    %489 = vmatprep.subr.mxu0 0.0
    %490 = vmatpush1.msra.mxu0 0.0
    %491 = vmatprep.subr.mxu0 0.0
    %492 = vmatpush1.msra.mxu0 0.0
    %493 = vmatprep.subr.mxu0 0.0
    %494 = vmatpush1.msra.mxu0 0.0
    %495 = vmatprep.mubr.f32.mxu0 0.0
    %496 = vmatmul.mubr.f32.gmra.mrb[0].mxu0 %v429
    %v497 = vpop.f32.mrb[0].mxu0
    %v498 = vadd.f32 0.0, %v497
    %v499 = vpop.f32.mrb[0].mxu0
    %500 = vdwg.mxu0
    %v501 = vadd.f32 %v427, %v498
    %v502 = vmul.f32 %v501, 0.5
    %v503 = vtanh.pop %v502
    %v504 = vmul.f32 %v503, 0.5
    %v505 = vadd.f32 %v504, 0.5
    %v506 = vadd.f32 %v498, %v399
    %508 = vrot.lane.b32.xlu0 %v506, 64
    %v509 = vpop.permute.xlu0 %508
    %v511 = vmul.f32 %v505, %v509
    %513 = vrot.lane.b32.xlu0 %v511, 64
    %v514 = vpop.permute.xlu0 %513
    %v516 = vadd.f32 %v427, %v514
    %v517 = vtanh.pop %v516
    %s518 = scalar_lea.vmem [#allocation3], 8
    %v519 = vld [vmem:[%s518] sm:$0xff]
    %v520 = vsub.f32 1.0, %v505
    %522 = vrot.lane.b32.xlu0 %v520, 96
    %v523 = vpop.permute.xlu0 %522
    %v525 = vmul.f32 %v519, %v523
    %526 = vrot.lane.b32.xlu0 %v425, 64
    %v527 = vpop.permute.xlu0 %526
    %v529 = vsub.f32 %v517, %v527
    %531 = vrot.lane.b32.xlu0 %v529, 64
    %v532 = vpop.permute.xlu0 %531
    %v534 = vmul.f32 %v525, %v532
    %v535 = vadd.f32 %v425, %v534
    %s536 = scalar_lea.vmem [#allocation2], 16
    %v537 = vld [vmem:[%s536] sm:$0xff]
    %v539 = vsel %vm298, %v535, 0
    %541 = vmatprep.subr.mxu0 0.0
    %542 = vmatpush1.msra.mxu0 %v309
    %543 = vmatprep.subr.mxu0 0.0
    %544 = vmatpush1.msra.mxu0 %v310
    %545 = vmatprep.subr.mxu0 0.0
    %546 = vmatpush1.msra.mxu0 %v311
    %547 = vmatprep.subr.mxu0 0.0
    %548 = vmatpush1.msra.mxu0 %v312
    %549 = vmatprep.subr.mxu0 0.0
    %550 = vmatpush1.msra.mxu0 0.0
    %551 = vmatprep.subr.mxu0 0.0
    %552 = vmatpush1.msra.mxu0 0.0
    %553 = vmatprep.subr.mxu0 0.0
    %554 = vmatpush1.msra.mxu0 0.0
    %555 = vmatprep.subr.mxu0 0.0
    %556 = vmatpush1.msra.mxu0 0.0
    %557 = vmatprep.subr.mxu0 0.0
    %558 = vmatpush1.msra.mxu0 0.0
    %559 = vmatprep.subr.mxu0 0.0
    %560 = vmatpush1.msra.mxu0 0.0
    %561 = vmatprep.subr.mxu0 0.0
    %562 = vmatpush1.msra.mxu0 0.0
    %563 = vmatprep.subr.mxu0 0.0
    %564 = vmatpush1.msra.mxu0 0.0
    %565 = vmatprep.subr.mxu0 0.0
    %566 = vmatpush1.msra.mxu0 0.0
    %567 = vmatprep.subr.mxu0 0.0
    %568 = vmatpush1.msra.mxu0 0.0
    %569 = vmatprep.subr.mxu0 0.0
    %570 = vmatpush1.msra.mxu0 0.0
    %571 = vmatprep.subr.mxu0 0.0
    %572 = vmatpush1.msra.mxu0 0.0
    %573 = vmatprep.subr.mxu0 0.0
    %574 = vmatpush1.msra.mxu0 0.0
    %575 = vmatprep.subr.mxu0 0.0
    %576 = vmatpush1.msra.mxu0 0.0
    %577 = vmatprep.subr.mxu0 0.0
    %578 = vmatpush1.msra.mxu0 0.0
    %579 = vmatprep.subr.mxu0 0.0
    %580 = vmatpush1.msra.mxu0 0.0
    %581 = vmatprep.subr.mxu0 0.0
    %582 = vmatpush1.msra.mxu0 0.0
    %583 = vmatprep.subr.mxu0 0.0
    %584 = vmatpush1.msra.mxu0 0.0
    %585 = vmatprep.subr.mxu0 0.0
    %586 = vmatpush1.msra.mxu0 0.0
    %587 = vmatprep.subr.mxu0 0.0
    %588 = vmatpush1.msra.mxu0 0.0
    %589 = vmatprep.subr.mxu0 0.0
    %590 = vmatpush1.msra.mxu0 0.0
    %591 = vmatprep.subr.mxu0 0.0
    %592 = vmatpush1.msra.mxu0 0.0
    %593 = vmatprep.subr.mxu0 0.0
    %594 = vmatpush1.msra.mxu0 0.0
    %595 = vmatprep.subr.mxu0 0.0
    %596 = vmatpush1.msra.mxu0 0.0
    %597 = vmatprep.subr.mxu0 0.0
    %598 = vmatpush1.msra.mxu0 0.0
    %599 = vmatprep.subr.mxu0 0.0
    %600 = vmatpush1.msra.mxu0 0.0
    %601 = vmatprep.subr.mxu0 0.0
    %602 = vmatpush1.msra.mxu0 0.0
    %603 = vmatprep.subr.mxu0 0.0
    %604 = vmatpush1.msra.mxu0 0.0
    %605 = vmatprep.mubr.f32.mxu0 0.0
    %606 = vmatmul.mubr.f32.gmra.mrb[0].mxu0 %v539
    %v607 = vpop.f32.mrb[0].mxu0
    %v608 = vadd.f32 0.0, %v607
    %v609 = vpop.f32.mrb[0].mxu0
    %610 = vdwg.mxu0
    %v611 = vadd.f32 %v537, %v608
    %v612 = vmul.f32 %v611, 0.5
    %v613 = vtanh.pop %v612
    %v614 = vmul.f32 %v613, 0.5
    %v615 = vadd.f32 %v614, 0.5
    %v616 = vadd.f32 %v608, %v399
    %618 = vrot.lane.b32.xlu0 %v616, 64
    %v619 = vpop.permute.xlu0 %618
    %v621 = vmul.f32 %v615, %v619
    %623 = vrot.lane.b32.xlu0 %v621, 64
    %v624 = vpop.permute.xlu0 %623
    %v626 = vadd.f32 %v537, %v624
    %v627 = vtanh.pop %v626
    %s628 = scalar_lea.vmem [#allocation3], 16
    %v629 = vld [vmem:[%s628] sm:$0xff]
    %v630 = vsub.f32 1.0, %v615
    %632 = vrot.lane.b32.xlu0 %v630, 96
    %v633 = vpop.permute.xlu0 %632
    %v635 = vmul.f32 %v629, %v633
    %636 = vrot.lane.b32.xlu0 %v535, 64
    %v637 = vpop.permute.xlu0 %636
    %v639 = vsub.f32 %v627, %v637
    %641 = vrot.lane.b32.xlu0 %v639, 64
    %v642 = vpop.permute.xlu0 %641
    %v644 = vmul.f32 %v635, %v642
    %v645 = vadd.f32 %v535, %v644
    %s646 = scalar_lea.vmem [#allocation2], 24
    %v647 = vld [vmem:[%s646] sm:$0xff]
    %v649 = vsel %vm298, %v645, 0
    %651 = vmatprep.subr.mxu0 0.0
    %652 = vmatpush1.msra.mxu0 %v309
    %653 = vmatprep.subr.mxu0 0.0
    %654 = vmatpush1.msra.mxu0 %v310
    %655 = vmatprep.subr.mxu0 0.0
    %656 = vmatpush1.msra.mxu0 %v311
    %657 = vmatprep.subr.mxu0 0.0
    %658 = vmatpush1.msra.mxu0 %v312
    %659 = vmatprep.subr.mxu0 0.0
    %660 = vmatpush1.msra.mxu0 0.0
    %661 = vmatprep.subr.mxu0 0.0
    %662 = vmatpush1.msra.mxu0 0.0
    %663 = vmatprep.subr.mxu0 0.0
    %664 = vmatpush1.msra.mxu0 0.0
    %665 = vmatprep.subr.mxu0 0.0
    %666 = vmatpush1.msra.mxu0 0.0
    %667 = vmatprep.subr.mxu0 0.0
    %668 = vmatpush1.msra.mxu0 0.0
    %669 = vmatprep.subr.mxu0 0.0
    %670 = vmatpush1.msra.mxu0 0.0
    %671 = vmatprep.subr.mxu0 0.0
    %672 = vmatpush1.msra.mxu0 0.0
    %673 = vmatprep.subr.mxu0 0.0
    %674 = vmatpush1.msra.mxu0 0.0
    %675 = vmatprep.subr.mxu0 0.0
    %676 = vmatpush1.msra.mxu0 0.0
    %677 = vmatprep.subr.mxu0 0.0
    %678 = vmatpush1.msra.mxu0 0.0
    %679 = vmatprep.subr.mxu0 0.0
    %680 = vmatpush1.msra.mxu0 0.0
    %681 = vmatprep.subr.mxu0 0.0
    %682 = vmatpush1.msra.mxu0 0.0
    %683 = vmatprep.subr.mxu0 0.0
    %684 = vmatpush1.msra.mxu0 0.0
    %685 = vmatprep.subr.mxu0 0.0
    %686 = vmatpush1.msra.mxu0 0.0
    %687 = vmatprep.subr.mxu0 0.0
    %688 = vmatpush1.msra.mxu0 0.0
    %689 = vmatprep.subr.mxu0 0.0
    %690 = vmatpush1.msra.mxu0 0.0
    %691 = vmatprep.subr.mxu0 0.0
    %692 = vmatpush1.msra.mxu0 0.0
    %693 = vmatprep.subr.mxu0 0.0
    %694 = vmatpush1.msra.mxu0 0.0
    %695 = vmatprep.subr.mxu0 0.0
    %696 = vmatpush1.msra.mxu0 0.0
    %697 = vmatprep.subr.mxu0 0.0
    %698 = vmatpush1.msra.mxu0 0.0
    %699 = vmatprep.subr.mxu0 0.0
    %700 = vmatpush1.msra.mxu0 0.0
    %701 = vmatprep.subr.mxu0 0.0
    %702 = vmatpush1.msra.mxu0 0.0
    %703 = vmatprep.subr.mxu0 0.0
    %704 = vmatpush1.msra.mxu0 0.0
    %705 = vmatprep.subr.mxu0 0.0
    %706 = vmatpush1.msra.mxu0 0.0
    %707 = vmatprep.subr.mxu0 0.0
    %708 = vmatpush1.msra.mxu0 0.0
    %709 = vmatprep.subr.mxu0 0.0
    %710 = vmatpush1.msra.mxu0 0.0
    %711 = vmatprep.subr.mxu0 0.0
    %712 = vmatpush1.msra.mxu0 0.0
    %713 = vmatprep.subr.mxu0 0.0
    %714 = vmatpush1.msra.mxu0 0.0
    %715 = vmatprep.mubr.f32.mxu0 0.0
    %716 = vmatmul.mubr.f32.gmra.mrb[0].mxu0 %v649
    %v717 = vpop.f32.mrb[0].mxu0
    %v718 = vadd.f32 0.0, %v717
    %v719 = vpop.f32.mrb[0].mxu0
    %720 = vdwg.mxu0
    %v721 = vadd.f32 %v647, %v718
    %v722 = vmul.f32 %v721, 0.5
    %v723 = vtanh.pop %v722
    %v724 = vmul.f32 %v723, 0.5
    %v725 = vadd.f32 %v724, 0.5
    %v726 = vadd.f32 %v718, %v399
    %728 = vrot.lane.b32.xlu0 %v726, 64
    %v729 = vpop.permute.xlu0 %728
    %v731 = vmul.f32 %v725, %v729
    %733 = vrot.lane.b32.xlu0 %v731, 64
    %v734 = vpop.permute.xlu0 %733
    %v736 = vadd.f32 %v647, %v734
    %v737 = vtanh.pop %v736
    %s738 = scalar_lea.vmem [#allocation3], 24
    %v739 = vld [vmem:[%s738] sm:$0xff]
    %v740 = vsub.f32 1.0, %v725
    %742 = vrot.lane.b32.xlu0 %v740, 96
    %v743 = vpop.permute.xlu0 %742
    %v745 = vmul.f32 %v739, %v743
    %746 = vrot.lane.b32.xlu0 %v645, 64
    %v747 = vpop.permute.xlu0 %746
    %v749 = vsub.f32 %v737, %v747
    %751 = vrot.lane.b32.xlu0 %v749, 64
    %v752 = vpop.permute.xlu0 %751
    %v754 = vmul.f32 %v745, %v752
    %v755 = vadd.f32 %v645, %v754
    %s756 = scalar_lea.vmem [#allocation2], 32
    %v757 = vld [vmem:[%s756] sm:$0xff]
    %v759 = vsel %vm298, %v755, 0
    %761 = vmatprep.subr.mxu0 0.0
    %762 = vmatpush1.msra.mxu0 %v309
    %763 = vmatprep.subr.mxu0 0.0
    %764 = vmatpush1.msra.mxu0 %v310
    %765 = vmatprep.subr.mxu0 0.0
    %766 = vmatpush1.msra.mxu0 %v311
    %767 = vmatprep.subr.mxu0 0.0
    %768 = vmatpush1.msra.mxu0 %v312
    %769 = vmatprep.subr.mxu0 0.0
    %770 = vmatpush1.msra.mxu0 0.0
    %771 = vmatprep.subr.mxu0 0.0
    %772 = vmatpush1.msra.mxu0 0.0
    %773 = vmatprep.subr.mxu0 0.0
    %774 = vmatpush1.msra.mxu0 0.0
    %775 = vmatprep.subr.mxu0 0.0
    %776 = vmatpush1.msra.mxu0 0.0
    %777 = vmatprep.subr.mxu0 0.0
    %778 = vmatpush1.msra.mxu0 0.0
    %779 = vmatprep.subr.mxu0 0.0
    %780 = vmatpush1.msra.mxu0 0.0
    %781 = vmatprep.subr.mxu0 0.0
    %782 = vmatpush1.msra.mxu0 0.0
    %783 = vmatprep.subr.mxu0 0.0
    %784 = vmatpush1.msra.mxu0 0.0
    %785 = vmatprep.subr.mxu0 0.0
    %786 = vmatpush1.msra.mxu0 0.0
    %787 = vmatprep.subr.mxu0 0.0
    %788 = vmatpush1.msra.mxu0 0.0
    %789 = vmatprep.subr.mxu0 0.0
    %790 = vmatpush1.msra.mxu0 0.0
    %791 = vmatprep.subr.mxu0 0.0
    %792 = vmatpush1.msra.mxu0 0.0
    %793 = vmatprep.subr.mxu0 0.0
    %794 = vmatpush1.msra.mxu0 0.0
    %795 = vmatprep.subr.mxu0 0.0
    %796 = vmatpush1.msra.mxu0 0.0
    %797 = vmatprep.subr.mxu0 0.0
    %798 = vmatpush1.msra.mxu0 0.0
    %799 = vmatprep.subr.mxu0 0.0
    %800 = vmatpush1.msra.mxu0 0.0
    %801 = vmatprep.subr.mxu0 0.0
    %802 = vmatpush1.msra.mxu0 0.0
    %803 = vmatprep.subr.mxu0 0.0
    %804 = vmatpush1.msra.mxu0 0.0
    %805 = vmatprep.subr.mxu0 0.0
    %806 = vmatpush1.msra.mxu0 0.0
    %807 = vmatprep.subr.mxu0 0.0
    %808 = vmatpush1.msra.mxu0 0.0
    %809 = vmatprep.subr.mxu0 0.0
    %810 = vmatpush1.msra.mxu0 0.0
    %811 = vmatprep.subr.mxu0 0.0
    %812 = vmatpush1.msra.mxu0 0.0
    %813 = vmatprep.subr.mxu0 0.0
    %814 = vmatpush1.msra.mxu0 0.0
    %815 = vmatprep.subr.mxu0 0.0
    %816 = vmatpush1.msra.mxu0 0.0
    %817 = vmatprep.subr.mxu0 0.0
    %818 = vmatpush1.msra.mxu0 0.0
    %819 = vmatprep.subr.mxu0 0.0
    %820 = vmatpush1.msra.mxu0 0.0
    %821 = vmatprep.subr.mxu0 0.0
    %822 = vmatpush1.msra.mxu0 0.0
    %823 = vmatprep.subr.mxu0 0.0
    %824 = vmatpush1.msra.mxu0 0.0
    %825 = vmatprep.mubr.f32.mxu0 0.0
    %826 = vmatmul.mubr.f32.gmra.mrb[0].mxu0 %v759
    %v827 = vpop.f32.mrb[0].mxu0
    %v828 = vadd.f32 0.0, %v827
    %v829 = vpop.f32.mrb[0].mxu0
    %830 = vdwg.mxu0
    %v831 = vadd.f32 %v757, %v828
    %v832 = vmul.f32 %v831, 0.5
    %v833 = vtanh.pop %v832
    %v834 = vmul.f32 %v833, 0.5
    %v835 = vadd.f32 %v834, 0.5
    %v836 = vadd.f32 %v828, %v399
    %838 = vrot.lane.b32.xlu0 %v836, 64
    %v839 = vpop.permute.xlu0 %838
    %v841 = vmul.f32 %v835, %v839
    %843 = vrot.lane.b32.xlu0 %v841, 64
    %v844 = vpop.permute.xlu0 %843
    %v846 = vadd.f32 %v757, %v844
    %v847 = vtanh.pop %v846
    %s848 = scalar_lea.vmem [#allocation3], 32
    %v849 = vld [vmem:[%s848] sm:$0xff]
    %v850 = vsub.f32 1.0, %v835
    %852 = vrot.lane.b32.xlu0 %v850, 96
    %v853 = vpop.permute.xlu0 %852
    %v855 = vmul.f32 %v849, %v853
    %856 = vrot.lane.b32.xlu0 %v755, 64
    %v857 = vpop.permute.xlu0 %856
    %v859 = vsub.f32 %v847, %v857
    %861 = vrot.lane.b32.xlu0 %v859, 64
    %v862 = vpop.permute.xlu0 %861
    %v864 = vmul.f32 %v855, %v862
    %v865 = vadd.f32 %v755, %v864
    %s866 = scalar_lea.vmem [#allocation2], 40
    %v867 = vld [vmem:[%s866] sm:$0xff]
    %v869 = vsel %vm298, %v865, 0
    %871 = vmatprep.subr.mxu0 0.0
    %872 = vmatpush1.msra.mxu0 %v309
    %873 = vmatprep.subr.mxu0 0.0
    %874 = vmatpush1.msra.mxu0 %v310
    %875 = vmatprep.subr.mxu0 0.0
    %876 = vmatpush1.msra.mxu0 %v311
    %877 = vmatprep.subr.mxu0 0.0
    %878 = vmatpush1.msra.mxu0 %v312
    %879 = vmatprep.subr.mxu0 0.0
    %880 = vmatpush1.msra.mxu0 0.0
    %881 = vmatprep.subr.mxu0 0.0
    %882 = vmatpush1.msra.mxu0 0.0
    %883 = vmatprep.subr.mxu0 0.0
    %884 = vmatpush1.msra.mxu0 0.0
    %885 = vmatprep.subr.mxu0 0.0
    %886 = vmatpush1.msra.mxu0 0.0
    %887 = vmatprep.subr.mxu0 0.0
    %888 = vmatpush1.msra.mxu0 0.0
    %889 = vmatprep.subr.mxu0 0.0
    %890 = vmatpush1.msra.mxu0 0.0
    %891 = vmatprep.subr.mxu0 0.0
    %892 = vmatpush1.msra.mxu0 0.0
    %893 = vmatprep.subr.mxu0 0.0
    %894 = vmatpush1.msra.mxu0 0.0
    %895 = vmatprep.subr.mxu0 0.0
    %896 = vmatpush1.msra.mxu0 0.0
    %897 = vmatprep.subr.mxu0 0.0
    %898 = vmatpush1.msra.mxu0 0.0
    %899 = vmatprep.subr.mxu0 0.0
    %900 = vmatpush1.msra.mxu0 0.0
    %901 = vmatprep.subr.mxu0 0.0
    %902 = vmatpush1.msra.mxu0 0.0
    %903 = vmatprep.subr.mxu0 0.0
    %904 = vmatpush1.msra.mxu0 0.0
    %905 = vmatprep.subr.mxu0 0.0
    %906 = vmatpush1.msra.mxu0 0.0
    %907 = vmatprep.subr.mxu0 0.0
    %908 = vmatpush1.msra.mxu0 0.0
    %909 = vmatprep.subr.mxu0 0.0
    %910 = vmatpush1.msra.mxu0 0.0
    %911 = vmatprep.subr.mxu0 0.0
    %912 = vmatpush1.msra.mxu0 0.0
    %913 = vmatprep.subr.mxu0 0.0
    %914 = vmatpush1.msra.mxu0 0.0
    %915 = vmatprep.subr.mxu0 0.0
    %916 = vmatpush1.msra.mxu0 0.0
    %917 = vmatprep.subr.mxu0 0.0
    %918 = vmatpush1.msra.mxu0 0.0
    %919 = vmatprep.subr.mxu0 0.0
    %920 = vmatpush1.msra.mxu0 0.0
    %921 = vmatprep.subr.mxu0 0.0
    %922 = vmatpush1.msra.mxu0 0.0
    %923 = vmatprep.subr.mxu0 0.0
    %924 = vmatpush1.msra.mxu0 0.0
    %925 = vmatprep.subr.mxu0 0.0
    %926 = vmatpush1.msra.mxu0 0.0
    %927 = vmatprep.subr.mxu0 0.0
    %928 = vmatpush1.msra.mxu0 0.0
    %929 = vmatprep.subr.mxu0 0.0
    %930 = vmatpush1.msra.mxu0 0.0
    %931 = vmatprep.subr.mxu0 0.0
    %932 = vmatpush1.msra.mxu0 0.0
    %933 = vmatprep.subr.mxu0 0.0
    %934 = vmatpush1.msra.mxu0 0.0
    %935 = vmatprep.mubr.f32.mxu0 0.0
    %936 = vmatmul.mubr.f32.gmra.mrb[0].mxu0 %v869
    %v937 = vpop.f32.mrb[0].mxu0
    %v938 = vadd.f32 0.0, %v937
    %v939 = vpop.f32.mrb[0].mxu0
    %940 = vdwg.mxu0
    %v941 = vadd.f32 %v867, %v938
    %v942 = vmul.f32 %v941, 0.5
    %v943 = vtanh.pop %v942
    %v944 = vmul.f32 %v943, 0.5
    %v945 = vadd.f32 %v944, 0.5
    %v946 = vadd.f32 %v938, %v399
    %948 = vrot.lane.b32.xlu0 %v946, 64
    %v949 = vpop.permute.xlu0 %948
    %v951 = vmul.f32 %v945, %v949
    %953 = vrot.lane.b32.xlu0 %v951, 64
    %v954 = vpop.permute.xlu0 %953
    %v956 = vadd.f32 %v867, %v954
    %v957 = vtanh.pop %v956
    %s958 = scalar_lea.vmem [#allocation3], 40
    %v959 = vld [vmem:[%s958] sm:$0xff]
    %v960 = vsub.f32 1.0, %v945
    %962 = vrot.lane.b32.xlu0 %v960, 96
    %v963 = vpop.permute.xlu0 %962
    %v965 = vmul.f32 %v959, %v963
    %966 = vrot.lane.b32.xlu0 %v865, 64
    %v967 = vpop.permute.xlu0 %966
    %v969 = vsub.f32 %v957, %v967
    %971 = vrot.lane.b32.xlu0 %v969, 64
    %v972 = vpop.permute.xlu0 %971
    %v974 = vmul.f32 %v965, %v972
    %v975 = vadd.f32 %v865, %v974
    %s976 = scalar_lea.vmem [#allocation2], 48
    %v977 = vld [vmem:[%s976] sm:$0xff]
    %v979 = vsel %vm298, %v975, 0
    %981 = vmatprep.subr.mxu0 0.0
    %982 = vmatpush1.msra.mxu0 %v309
    %983 = vmatprep.subr.mxu0 0.0
    %984 = vmatpush1.msra.mxu0 %v310
    %985 = vmatprep.subr.mxu0 0.0
    %986 = vmatpush1.msra.mxu0 %v311
    %987 = vmatprep.subr.mxu0 0.0
    %988 = vmatpush1.msra.mxu0 %v312
    %989 = vmatprep.subr.mxu0 0.0
    %990 = vmatpush1.msra.mxu0 0.0
    %991 = vmatprep.subr.mxu0 0.0
    %992 = vmatpush1.msra.mxu0 0.0
    %993 = vmatprep.subr.mxu0 0.0
    %994 = vmatpush1.msra.mxu0 0.0
    %995 = vmatprep.subr.mxu0 0.0
    %996 = vmatpush1.msra.mxu0 0.0
    %997 = vmatprep.subr.mxu0 0.0
    %998 = vmatpush1.msra.mxu0 0.0
    %999 = vmatprep.subr.mxu0 0.0
    %1000 = vmatpush1.msra.mxu0 0.0
    %1001 = vmatprep.subr.mxu0 0.0
    %1002 = vmatpush1.msra.mxu0 0.0
    %1003 = vmatprep.subr.mxu0 0.0
    %1004 = vmatpush1.msra.mxu0 0.0
    %1005 = vmatprep.subr.mxu0 0.0
    %1006 = vmatpush1.msra.mxu0 0.0
    %1007 = vmatprep.subr.mxu0 0.0
    %1008 = vmatpush1.msra.mxu0 0.0
    %1009 = vmatprep.subr.mxu0 0.0
    %1010 = vmatpush1.msra.mxu0 0.0
    %1011 = vmatprep.subr.mxu0 0.0
    %1012 = vmatpush1.msra.mxu0 0.0
    %1013 = vmatprep.subr.mxu0 0.0
    %1014 = vmatpush1.msra.mxu0 0.0
    %1015 = vmatprep.subr.mxu0 0.0
    %1016 = vmatpush1.msra.mxu0 0.0
    %1017 = vmatprep.subr.mxu0 0.0
    %1018 = vmatpush1.msra.mxu0 0.0
    %1019 = vmatprep.subr.mxu0 0.0
    %1020 = vmatpush1.msra.mxu0 0.0
    %1021 = vmatprep.subr.mxu0 0.0
    %1022 = vmatpush1.msra.mxu0 0.0
    %1023 = vmatprep.subr.mxu0 0.0
    %1024 = vmatpush1.msra.mxu0 0.0
    %1025 = vmatprep.subr.mxu0 0.0
    %1026 = vmatpush1.msra.mxu0 0.0
    %1027 = vmatprep.subr.mxu0 0.0
    %1028 = vmatpush1.msra.mxu0 0.0
    %1029 = vmatprep.subr.mxu0 0.0
    %1030 = vmatpush1.msra.mxu0 0.0
    %1031 = vmatprep.subr.mxu0 0.0
    %1032 = vmatpush1.msra.mxu0 0.0
    %1033 = vmatprep.subr.mxu0 0.0
    %1034 = vmatpush1.msra.mxu0 0.0
    %1035 = vmatprep.subr.mxu0 0.0
    %1036 = vmatpush1.msra.mxu0 0.0
    %1037 = vmatprep.subr.mxu0 0.0
    %1038 = vmatpush1.msra.mxu0 0.0
    %1039 = vmatprep.subr.mxu0 0.0
    %1040 = vmatpush1.msra.mxu0 0.0
    %1041 = vmatprep.subr.mxu0 0.0
    %1042 = vmatpush1.msra.mxu0 0.0
    %1043 = vmatprep.subr.mxu0 0.0
    %1044 = vmatpush1.msra.mxu0 0.0
    %1045 = vmatprep.mubr.f32.mxu0 0.0
    %1046 = vmatmul.mubr.f32.gmra.mrb[0].mxu0 %v979
    %v1047 = vpop.f32.mrb[0].mxu0
    %v1048 = vadd.f32 0.0, %v1047
    %v1049 = vpop.f32.mrb[0].mxu0
    %1050 = vdwg.mxu0
    %v1051 = vadd.f32 %v977, %v1048
    %v1052 = vmul.f32 %v1051, 0.5
    %v1053 = vtanh.pop %v1052
    %v1054 = vmul.f32 %v1053, 0.5
    %v1055 = vadd.f32 %v1054, 0.5
    %v1056 = vadd.f32 %v1048, %v399
    %1058 = vrot.lane.b32.xlu0 %v1056, 64
    %v1059 = vpop.permute.xlu0 %1058
    %v1061 = vmul.f32 %v1055, %v1059
    %1063 = vrot.lane.b32.xlu0 %v1061, 64
    %v1064 = vpop.permute.xlu0 %1063
    %v1066 = vadd.f32 %v977, %v1064
    %v1067 = vtanh.pop %v1066
    %s1068 = scalar_lea.vmem [#allocation3], 48
    %v1069 = vld [vmem:[%s1068] sm:$0xff]
    %v1070 = vsub.f32 1.0, %v1055
    %1072 = vrot.lane.b32.xlu0 %v1070, 96
    %v1073 = vpop.permute.xlu0 %1072
    %v1075 = vmul.f32 %v1069, %v1073
    %1076 = vrot.lane.b32.xlu0 %v975, 64
    %v1077 = vpop.permute.xlu0 %1076
    %v1079 = vsub.f32 %v1067, %v1077
    %1081 = vrot.lane.b32.xlu0 %v1079, 64
    %v1082 = vpop.permute.xlu0 %1081
    %v1084 = vmul.f32 %v1075, %v1082
    %v1085 = vadd.f32 %v975, %v1084
    %s1086 = scalar_lea.vmem [#allocation2], 56
    %v1087 = vld [vmem:[%s1086] sm:$0xff]
    %v1089 = vsel %vm298, %v1085, 0
    %1091 = vmatprep.subr.mxu0 0.0
    %1092 = vmatpush1.msra.mxu0 %v309
    %1093 = vmatprep.subr.mxu0 0.0
    %1094 = vmatpush1.msra.mxu0 %v310
    %1095 = vmatprep.subr.mxu0 0.0
    %1096 = vmatpush1.msra.mxu0 %v311
    %1097 = vmatprep.subr.mxu0 0.0
    %1098 = vmatpush1.msra.mxu0 %v312
    %1099 = vmatprep.subr.mxu0 0.0
    %1100 = vmatpush1.msra.mxu0 0.0
    %1101 = vmatprep.subr.mxu0 0.0
    %1102 = vmatpush1.msra.mxu0 0.0
    %1103 = vmatprep.subr.mxu0 0.0
    %1104 = vmatpush1.msra.mxu0 0.0
    %1105 = vmatprep.subr.mxu0 0.0
    %1106 = vmatpush1.msra.mxu0 0.0
    %1107 = vmatprep.subr.mxu0 0.0
    %1108 = vmatpush1.msra.mxu0 0.0
    %1109 = vmatprep.subr.mxu0 0.0
    %1110 = vmatpush1.msra.mxu0 0.0
    %1111 = vmatprep.subr.mxu0 0.0
    %1112 = vmatpush1.msra.mxu0 0.0
    %1113 = vmatprep.subr.mxu0 0.0
    %1114 = vmatpush1.msra.mxu0 0.0
    %1115 = vmatprep.subr.mxu0 0.0
    %1116 = vmatpush1.msra.mxu0 0.0
    %1117 = vmatprep.subr.mxu0 0.0
    %1118 = vmatpush1.msra.mxu0 0.0
    %1119 = vmatprep.subr.mxu0 0.0
    %1120 = vmatpush1.msra.mxu0 0.0
    %1121 = vmatprep.subr.mxu0 0.0
    %1122 = vmatpush1.msra.mxu0 0.0
    %1123 = vmatprep.subr.mxu0 0.0
    %1124 = vmatpush1.msra.mxu0 0.0
    %1125 = vmatprep.subr.mxu0 0.0
    %1126 = vmatpush1.msra.mxu0 0.0
    %1127 = vmatprep.subr.mxu0 0.0
    %1128 = vmatpush1.msra.mxu0 0.0
    %1129 = vmatprep.subr.mxu0 0.0
    %1130 = vmatpush1.msra.mxu0 0.0
    %1131 = vmatprep.subr.mxu0 0.0
    %1132 = vmatpush1.msra.mxu0 0.0
    %1133 = vmatprep.subr.mxu0 0.0
    %1134 = vmatpush1.msra.mxu0 0.0
    %1135 = vmatprep.subr.mxu0 0.0
    %1136 = vmatpush1.msra.mxu0 0.0
    %1137 = vmatprep.subr.mxu0 0.0
    %1138 = vmatpush1.msra.mxu0 0.0
    %1139 = vmatprep.subr.mxu0 0.0
    %1140 = vmatpush1.msra.mxu0 0.0
    %1141 = vmatprep.subr.mxu0 0.0
    %1142 = vmatpush1.msra.mxu0 0.0
    %1143 = vmatprep.subr.mxu0 0.0
    %1144 = vmatpush1.msra.mxu0 0.0
    %1145 = vmatprep.subr.mxu0 0.0
    %1146 = vmatpush1.msra.mxu0 0.0
    %1147 = vmatprep.subr.mxu0 0.0
    %1148 = vmatpush1.msra.mxu0 0.0
    %1149 = vmatprep.subr.mxu0 0.0
    %1150 = vmatpush1.msra.mxu0 0.0
    %1151 = vmatprep.subr.mxu0 0.0
    %1152 = vmatpush1.msra.mxu0 0.0
    %1153 = vmatprep.subr.mxu0 0.0
    %1154 = vmatpush1.msra.mxu0 0.0
    %1155 = vmatprep.mubr.f32.mxu0 0.0
    %1156 = vmatmul.mubr.f32.gmra.mrb[0].mxu0 %v1089
    %v1157 = vpop.f32.mrb[0].mxu0
    %v1158 = vadd.f32 0.0, %v1157
    %v1159 = vpop.f32.mrb[0].mxu0
    %1160 = vdwg.mxu0
    %v1161 = vadd.f32 %v1087, %v1158
    %v1162 = vmul.f32 %v1161, 0.5
    %v1163 = vtanh.pop %v1162
    %v1164 = vmul.f32 %v1163, 0.5
    %v1165 = vadd.f32 %v1164, 0.5
    %v1166 = vadd.f32 %v1158, %v399
    %1168 = vrot.lane.b32.xlu0 %v1166, 64
    %v1169 = vpop.permute.xlu0 %1168
    %v1171 = vmul.f32 %v1165, %v1169
    %1173 = vrot.lane.b32.xlu0 %v1171, 64
    %v1174 = vpop.permute.xlu0 %1173
    %v1176 = vadd.f32 %v1087, %v1174
    %v1177 = vtanh.pop %v1176
    %s1178 = scalar_lea.vmem [#allocation3], 56
    %v1179 = vld [vmem:[%s1178] sm:$0xff]
    %v1180 = vsub.f32 1.0, %v1165
    %1182 = vrot.lane.b32.xlu0 %v1180, 96
    %v1183 = vpop.permute.xlu0 %1182
    %v1185 = vmul.f32 %v1179, %v1183
    %1186 = vrot.lane.b32.xlu0 %v1085, 64
    %v1187 = vpop.permute.xlu0 %1186
    %v1189 = vsub.f32 %v1177, %v1187
    %1191 = vrot.lane.b32.xlu0 %v1189, 64
    %v1192 = vpop.permute.xlu0 %1191
    %v1194 = vmul.f32 %v1185, %v1192
    %v1195 = vadd.f32 %v1085, %v1194
    %s1196 = scalar_lea.vmem [#allocation2], 64
    %v1197 = vld [vmem:[%s1196] sm:$0xff]
    %v1199 = vsel %vm298, %v1195, 0
    %1201 = vmatprep.subr.mxu0 0.0
    %1202 = vmatpush1.msra.mxu0 %v309
    %1203 = vmatprep.subr.mxu0 0.0
    %1204 = vmatpush1.msra.mxu0 %v310
    %1205 = vmatprep.subr.mxu0 0.0
    %1206 = vmatpush1.msra.mxu0 %v311
    %1207 = vmatprep.subr.mxu0 0.0
    %1208 = vmatpush1.msra.mxu0 %v312
    %1209 = vmatprep.subr.mxu0 0.0
    %1210 = vmatpush1.msra.mxu0 0.0
    %1211 = vmatprep.subr.mxu0 0.0
    %1212 = vmatpush1.msra.mxu0 0.0
    %1213 = vmatprep.subr.mxu0 0.0
    %1214 = vmatpush1.msra.mxu0 0.0
    %1215 = vmatprep.subr.mxu0 0.0
    %1216 = vmatpush1.msra.mxu0 0.0
    %1217 = vmatprep.subr.mxu0 0.0
    %1218 = vmatpush1.msra.mxu0 0.0
    %1219 = vmatprep.subr.mxu0 0.0
    %1220 = vmatpush1.msra.mxu0 0.0
    %1221 = vmatprep.subr.mxu0 0.0
    %1222 = vmatpush1.msra.mxu0 0.0
    %1223 = vmatprep.subr.mxu0 0.0
    %1224 = vmatpush1.msra.mxu0 0.0
    %1225 = vmatprep.subr.mxu0 0.0
    %1226 = vmatpush1.msra.mxu0 0.0
    %1227 = vmatprep.subr.mxu0 0.0
    %1228 = vmatpush1.msra.mxu0 0.0
    %1229 = vmatprep.subr.mxu0 0.0
    %1230 = vmatpush1.msra.mxu0 0.0
    %1231 = vmatprep.subr.mxu0 0.0
    %1232 = vmatpush1.msra.mxu0 0.0
    %1233 = vmatprep.subr.mxu0 0.0
    %1234 = vmatpush1.msra.mxu0 0.0
    %1235 = vmatprep.subr.mxu0 0.0
    %1236 = vmatpush1.msra.mxu0 0.0
    %1237 = vmatprep.subr.mxu0 0.0
    %1238 = vmatpush1.msra.mxu0 0.0
    %1239 = vmatprep.subr.mxu0 0.0
    %1240 = vmatpush1.msra.mxu0 0.0
    %1241 = vmatprep.subr.mxu0 0.0
    %1242 = vmatpush1.msra.mxu0 0.0
    %1243 = vmatprep.subr.mxu0 0.0
    %1244 = vmatpush1.msra.mxu0 0.0
    %1245 = vmatprep.subr.mxu0 0.0
    %1246 = vmatpush1.msra.mxu0 0.0
    %1247 = vmatprep.subr.mxu0 0.0
    %1248 = vmatpush1.msra.mxu0 0.0
    %1249 = vmatprep.subr.mxu0 0.0
    %1250 = vmatpush1.msra.mxu0 0.0
    %1251 = vmatprep.subr.mxu0 0.0
    %1252 = vmatpush1.msra.mxu0 0.0
    %1253 = vmatprep.subr.mxu0 0.0
    %1254 = vmatpush1.msra.mxu0 0.0
    %1255 = vmatprep.subr.mxu0 0.0
    %1256 = vmatpush1.msra.mxu0 0.0
    %1257 = vmatprep.subr.mxu0 0.0
    %1258 = vmatpush1.msra.mxu0 0.0
    %1259 = vmatprep.subr.mxu0 0.0
    %1260 = vmatpush1.msra.mxu0 0.0
    %1261 = vmatprep.subr.mxu0 0.0
    %1262 = vmatpush1.msra.mxu0 0.0
    %1263 = vmatprep.subr.mxu0 0.0
    %1264 = vmatpush1.msra.mxu0 0.0
    %1265 = vmatprep.mubr.f32.mxu0 0.0
    %1266 = vmatmul.mubr.f32.gmra.mrb[0].mxu0 %v1199
    %v1267 = vpop.f32.mrb[0].mxu0
    %v1268 = vadd.f32 0.0, %v1267
    %v1269 = vpop.f32.mrb[0].mxu0
    %1270 = vdwg.mxu0
    %v1271 = vadd.f32 %v1197, %v1268
    %v1272 = vmul.f32 %v1271, 0.5
    %v1273 = vtanh.pop %v1272
    %v1274 = vmul.f32 %v1273, 0.5
    %v1275 = vadd.f32 %v1274, 0.5
    %v1276 = vadd.f32 %v1268, %v399
    %1278 = vrot.lane.b32.xlu0 %v1276, 64
    %v1279 = vpop.permute.xlu0 %1278
    %v1281 = vmul.f32 %v1275, %v1279
    %1283 = vrot.lane.b32.xlu0 %v1281, 64
    %v1284 = vpop.permute.xlu0 %1283
    %v1286 = vadd.f32 %v1197, %v1284
    %v1287 = vtanh.pop %v1286
    %s1288 = scalar_lea.vmem [#allocation3], 64
    %v1289 = vld [vmem:[%s1288] sm:$0xff]
    %v1290 = vsub.f32 1.0, %v1275
    %1292 = vrot.lane.b32.xlu0 %v1290, 96
    %v1293 = vpop.permute.xlu0 %1292
    %v1295 = vmul.f32 %v1289, %v1293
    %1296 = vrot.lane.b32.xlu0 %v1195, 64
    %v1297 = vpop.permute.xlu0 %1296
    %v1299 = vsub.f32 %v1287, %v1297
    %1301 = vrot.lane.b32.xlu0 %v1299, 64
    %v1302 = vpop.permute.xlu0 %1301
    %v1304 = vmul.f32 %v1295, %v1302
    %v1305 = vadd.f32 %v1195, %v1304
    %s1306 = scalar_lea.vmem [#allocation2], 72
    %v1307 = vld [vmem:[%s1306] sm:$0xff]
    %v1309 = vsel %vm298, %v1305, 0
    %1311 = vmatprep.subr.mxu0 0.0
    %1312 = vmatpush1.msra.mxu0 %v309
    %1313 = vmatprep.subr.mxu0 0.0
    %1314 = vmatpush1.msra.mxu0 %v310
    %1315 = vmatprep.subr.mxu0 0.0
    %1316 = vmatpush1.msra.mxu0 %v311
    %1317 = vmatprep.subr.mxu0 0.0
    %1318 = vmatpush1.msra.mxu0 %v312
    %1319 = vmatprep.subr.mxu0 0.0
    %1320 = vmatpush1.msra.mxu0 0.0
    %1321 = vmatprep.subr.mxu0 0.0
    %1322 = vmatpush1.msra.mxu0 0.0
    %1323 = vmatprep.subr.mxu0 0.0
    %1324 = vmatpush1.msra.mxu0 0.0
    %1325 = vmatprep.subr.mxu0 0.0
    %1326 = vmatpush1.msra.mxu0 0.0
    %1327 = vmatprep.subr.mxu0 0.0
    %1328 = vmatpush1.msra.mxu0 0.0
    %1329 = vmatprep.subr.mxu0 0.0
    %1330 = vmatpush1.msra.mxu0 0.0
    %1331 = vmatprep.subr.mxu0 0.0
    %1332 = vmatpush1.msra.mxu0 0.0
    %1333 = vmatprep.subr.mxu0 0.0
    %1334 = vmatpush1.msra.mxu0 0.0
    %1335 = vmatprep.subr.mxu0 0.0
    %1336 = vmatpush1.msra.mxu0 0.0
    %1337 = vmatprep.subr.mxu0 0.0
    %1338 = vmatpush1.msra.mxu0 0.0
    %1339 = vmatprep.subr.mxu0 0.0
    %1340 = vmatpush1.msra.mxu0 0.0
    %1341 = vmatprep.subr.mxu0 0.0
    %1342 = vmatpush1.msra.mxu0 0.0
    %1343 = vmatprep.subr.mxu0 0.0
    %1344 = vmatpush1.msra.mxu0 0.0
    %1345 = vmatprep.subr.mxu0 0.0
    %1346 = vmatpush1.msra.mxu0 0.0
    %1347 = vmatprep.subr.mxu0 0.0
    %1348 = vmatpush1.msra.mxu0 0.0
    %1349 = vmatprep.subr.mxu0 0.0
    %1350 = vmatpush1.msra.mxu0 0.0
    %1351 = vmatprep.subr.mxu0 0.0
    %1352 = vmatpush1.msra.mxu0 0.0
    %1353 = vmatprep.subr.mxu0 0.0
    %1354 = vmatpush1.msra.mxu0 0.0
    %1355 = vmatprep.subr.mxu0 0.0
    %1356 = vmatpush1.msra.mxu0 0.0
    %1357 = vmatprep.subr.mxu0 0.0
    %1358 = vmatpush1.msra.mxu0 0.0
    %1359 = vmatprep.subr.mxu0 0.0
    %1360 = vmatpush1.msra.mxu0 0.0
    %1361 = vmatprep.subr.mxu0 0.0
    %1362 = vmatpush1.msra.mxu0 0.0
    %1363 = vmatprep.subr.mxu0 0.0
    %1364 = vmatpush1.msra.mxu0 0.0
    %1365 = vmatprep.subr.mxu0 0.0
    %1366 = vmatpush1.msra.mxu0 0.0
    %1367 = vmatprep.subr.mxu0 0.0
    %1368 = vmatpush1.msra.mxu0 0.0
    %1369 = vmatprep.subr.mxu0 0.0
    %1370 = vmatpush1.msra.mxu0 0.0
    %1371 = vmatprep.subr.mxu0 0.0
    %1372 = vmatpush1.msra.mxu0 0.0
    %1373 = vmatprep.subr.mxu0 0.0
    %1374 = vmatpush1.msra.mxu0 0.0
    %1375 = vmatprep.mubr.f32.mxu0 0.0
    %1376 = vmatmul.mubr.f32.gmra.mrb[0].mxu0 %v1309
    %v1377 = vpop.f32.mrb[0].mxu0
    %v1378 = vadd.f32 0.0, %v1377
    %v1379 = vpop.f32.mrb[0].mxu0
    %1380 = vdwg.mxu0
    %v1381 = vadd.f32 %v1307, %v1378
    %v1382 = vmul.f32 %v1381, 0.5
    %v1383 = vtanh.pop %v1382
    %v1384 = vmul.f32 %v1383, 0.5
    %v1385 = vadd.f32 %v1384, 0.5
    %v1386 = vadd.f32 %v1378, %v399
    %1388 = vrot.lane.b32.xlu0 %v1386, 64
    %v1389 = vpop.permute.xlu0 %1388
    %v1391 = vmul.f32 %v1385, %v1389
    %1393 = vrot.lane.b32.xlu0 %v1391, 64
    %v1394 = vpop.permute.xlu0 %1393
    %v1396 = vadd.f32 %v1307, %v1394
    %v1397 = vtanh.pop %v1396
    %s1398 = scalar_lea.vmem [#allocation3], 72
    %v1399 = vld [vmem:[%s1398] sm:$0xff]
    %v1400 = vsub.f32 1.0, %v1385
    %1402 = vrot.lane.b32.xlu0 %v1400, 96
    %v1403 = vpop.permute.xlu0 %1402
    %v1405 = vmul.f32 %v1399, %v1403
    %1406 = vrot.lane.b32.xlu0 %v1305, 64
    %v1407 = vpop.permute.xlu0 %1406
    %v1409 = vsub.f32 %v1397, %v1407
    %1411 = vrot.lane.b32.xlu0 %v1409, 64
    %v1412 = vpop.permute.xlu0 %1411
    %v1414 = vmul.f32 %v1405, %v1412
    %v1415 = vadd.f32 %v1305, %v1414
    %v1416 = vld [vmem:[#allocation9] sm:$0xff]
    %v1417 = vld [vmem:[#allocation9 + $0x8] sm:$0xff]
    %v1418 = vld [vmem:[#allocation9 + $0x10] sm:$0xff]
    %v1419 = vld [vmem:[#allocation9 + $0x18] sm:$0xff]
    %v1420 = vld [vmem:[%s7] sm:$0x1]
    %v1422 = vlaneseq
    %v1423 = vshrl.u32 %v1422, 7
    %v1424 = vsub.s32 0, %v1423
    %v1425 = vrot.slane %v1420, %v1424
    %v1428 = vsel %vm298, %v1415, 0
    %1430 = vmatprep.subr.mxu0 0.0
    %1431 = vmatpush1.msra.mxu0 %v1416
    %1432 = vmatprep.subr.mxu0 0.0
    %1433 = vmatpush1.msra.mxu0 %v1417
    %1434 = vmatprep.subr.mxu0 0.0
    %1435 = vmatpush1.msra.mxu0 %v1418
    %1436 = vmatprep.subr.mxu0 0.0
    %1437 = vmatpush1.msra.mxu0 %v1419
    %1438 = vmatprep.subr.mxu0 0.0
    %1439 = vmatpush1.msra.mxu0 0.0
    %1440 = vmatprep.subr.mxu0 0.0
    %1441 = vmatpush1.msra.mxu0 0.0
    %1442 = vmatprep.subr.mxu0 0.0
    %1443 = vmatpush1.msra.mxu0 0.0
    %1444 = vmatprep.subr.mxu0 0.0
    %1445 = vmatpush1.msra.mxu0 0.0
    %1446 = vmatprep.subr.mxu0 0.0
    %1447 = vmatpush1.msra.mxu0 0.0
    %1448 = vmatprep.subr.mxu0 0.0
    %1449 = vmatpush1.msra.mxu0 0.0
    %1450 = vmatprep.subr.mxu0 0.0
    %1451 = vmatpush1.msra.mxu0 0.0
    %1452 = vmatprep.subr.mxu0 0.0
    %1453 = vmatpush1.msra.mxu0 0.0
    %1454 = vmatprep.subr.mxu0 0.0
    %1455 = vmatpush1.msra.mxu0 0.0
    %1456 = vmatprep.subr.mxu0 0.0
    %1457 = vmatpush1.msra.mxu0 0.0
    %1458 = vmatprep.subr.mxu0 0.0
    %1459 = vmatpush1.msra.mxu0 0.0
    %1460 = vmatprep.subr.mxu0 0.0
    %1461 = vmatpush1.msra.mxu0 0.0
    %1462 = vmatprep.subr.mxu0 0.0
    %1463 = vmatpush1.msra.mxu0 0.0
    %1464 = vmatprep.subr.mxu0 0.0
    %1465 = vmatpush1.msra.mxu0 0.0
    %1466 = vmatprep.subr.mxu0 0.0
    %1467 = vmatpush1.msra.mxu0 0.0
    %1468 = vmatprep.subr.mxu0 0.0
    %1469 = vmatpush1.msra.mxu0 0.0
    %1470 = vmatprep.subr.mxu0 0.0
    %1471 = vmatpush1.msra.mxu0 0.0
    %1472 = vmatprep.subr.mxu0 0.0
    %1473 = vmatpush1.msra.mxu0 0.0
    %1474 = vmatprep.subr.mxu0 0.0
    %1475 = vmatpush1.msra.mxu0 0.0
    %1476 = vmatprep.subr.mxu0 0.0
    %1477 = vmatpush1.msra.mxu0 0.0
    %1478 = vmatprep.subr.mxu0 0.0
    %1479 = vmatpush1.msra.mxu0 0.0
    %1480 = vmatprep.subr.mxu0 0.0
    %1481 = vmatpush1.msra.mxu0 0.0
    %1482 = vmatprep.subr.mxu0 0.0
    %1483 = vmatpush1.msra.mxu0 0.0
    %1484 = vmatprep.subr.mxu0 0.0
    %1485 = vmatpush1.msra.mxu0 0.0
    %1486 = vmatprep.subr.mxu0 0.0
    %1487 = vmatpush1.msra.mxu0 0.0
    %1488 = vmatprep.subr.mxu0 0.0
    %1489 = vmatpush1.msra.mxu0 0.0
    %1490 = vmatprep.subr.mxu0 0.0
    %1491 = vmatpush1.msra.mxu0 0.0
    %1492 = vmatprep.subr.mxu0 0.0
    %1493 = vmatpush1.msra.mxu0 0.0
    %1494 = vmatprep.mubr.f32.mxu0 0.0
    %1495 = vmatmul.mubr.f32.gmra.mrb[0].mxu0 %v1428
    %v1496 = vpop.f32.mrb[0].mxu0
    %v1497 = vadd.f32 %v1425, %v1496
    %v1498 = vpop.f32.mrb[0].mxu0
    %1499 = vdwg.mxu0
    %v1500 = vld [vmem:[%s8] sm:$0x3f]
    %vm1501 = vcmask 64512
    %v1503 = vsel %vm1501, %v1500, 0
    %1505 = vmatprep.subr.mxu0 0.0
    %1506 = vmatpush1.msra.mxu0 %v1497
    %1507 = vmatprep.subr.mxu0 0.0
    %1508 = vmatpush1.msra.mxu0 0.0
    %1509 = vmatprep.subr.mxu0 0.0
    %1510 = vmatpush1.msra.mxu0 0.0
    %1511 = vmatprep.subr.mxu0 0.0
    %1512 = vmatpush1.msra.mxu0 0.0
    %1513 = vmatprep.subr.mxu0 0.0
    %1514 = vmatpush1.msra.mxu0 0.0
    %1515 = vmatprep.subr.mxu0 0.0
    %1516 = vmatpush1.msra.mxu0 0.0
    %1517 = vmatprep.subr.mxu0 0.0
    %1518 = vmatpush1.msra.mxu0 0.0
    %1519 = vmatprep.subr.mxu0 0.0
    %1520 = vmatpush1.msra.mxu0 0.0
    %1521 = vmatprep.subr.mxu0 0.0
    %1522 = vmatpush1.msra.mxu0 0.0
    %1523 = vmatprep.subr.mxu0 0.0
    %1524 = vmatpush1.msra.mxu0 0.0
    %1525 = vmatprep.subr.mxu0 0.0
    %1526 = vmatpush1.msra.mxu0 0.0
    %1527 = vmatprep.subr.mxu0 0.0
    %1528 = vmatpush1.msra.mxu0 0.0
    %1529 = vmatprep.subr.mxu0 0.0
    %1530 = vmatpush1.msra.mxu0 0.0
    %1531 = vmatprep.subr.mxu0 0.0
    %1532 = vmatpush1.msra.mxu0 0.0
    %1533 = vmatprep.subr.mxu0 0.0
    %1534 = vmatpush1.msra.mxu0 0.0
    %1535 = vmatprep.subr.mxu0 0.0
    %1536 = vmatpush1.msra.mxu0 0.0
    %1537 = vmatprep.subr.mxu0 0.0
    %1538 = vmatpush1.msra.mxu0 0.0
    %1539 = vmatprep.subr.mxu0 0.0
    %1540 = vmatpush1.msra.mxu0 0.0
    %1541 = vmatprep.subr.mxu0 0.0
    %1542 = vmatpush1.msra.mxu0 0.0
    %1543 = vmatprep.subr.mxu0 0.0
    %1544 = vmatpush1.msra.mxu0 0.0
    %1545 = vmatprep.subr.mxu0 0.0
    %1546 = vmatpush1.msra.mxu0 0.0
    %1547 = vmatprep.subr.mxu0 0.0
    %1548 = vmatpush1.msra.mxu0 0.0
    %1549 = vmatprep.subr.mxu0 0.0
    %1550 = vmatpush1.msra.mxu0 0.0
    %1551 = vmatprep.subr.mxu0 0.0
    %1552 = vmatpush1.msra.mxu0 0.0
    %1553 = vmatprep.subr.mxu0 0.0
    %1554 = vmatpush1.msra.mxu0 0.0
    %1555 = vmatprep.subr.mxu0 0.0
    %1556 = vmatpush1.msra.mxu0 0.0
    %1557 = vmatprep.subr.mxu0 0.0
    %1558 = vmatpush1.msra.mxu0 0.0
    %1559 = vmatprep.subr.mxu0 0.0
    %1560 = vmatpush1.msra.mxu0 0.0
    %1561 = vmatprep.subr.mxu0 0.0
    %1562 = vmatpush1.msra.mxu0 0.0
    %1563 = vmatprep.subr.mxu0 0.0
    %1564 = vmatpush1.msra.mxu0 0.0
    %1565 = vmatprep.subr.mxu0 0.0
    %1566 = vmatpush1.msra.mxu0 0.0
    %1567 = vmatprep.subr.mxu0 0.0
    %1568 = vmatpush1.msra.mxu0 0.0
    %1569 = vmatprep.mubr.f32.mxu0 0.0
    %1570 = vmatmul.mubr.f32.gmra.mrb[0].mxu0 %v1503
    %v1571 = vpop.f32.mrb[0].mxu0
    %v1572 = vadd.f32 0.0, %v1571
    %v1573 = vpop.f32.mrb[0].mxu0
    %1574 = vdwg.mxu0
    %v1575 = vld [vmem:[%s9] sm:$0x3f]
    %v1577 = vsel %vm1501, %v1575, 0
    %1579 = vmatprep.subr.mxu0 0.0
    %1580 = vmatpush1.msra.mxu0 %v1415
    %1581 = vmatprep.subr.mxu0 0.0
    %1582 = vmatpush1.msra.mxu0 0.0
    %1583 = vmatprep.subr.mxu0 0.0
    %1584 = vmatpush1.msra.mxu0 0.0
    %1585 = vmatprep.subr.mxu0 0.0
    %1586 = vmatpush1.msra.mxu0 0.0
    %1587 = vmatprep.subr.mxu0 0.0
    %1588 = vmatpush1.msra.mxu0 0.0
    %1589 = vmatprep.subr.mxu0 0.0
    %1590 = vmatpush1.msra.mxu0 0.0
    %1591 = vmatprep.subr.mxu0 0.0
    %1592 = vmatpush1.msra.mxu0 0.0
    %1593 = vmatprep.subr.mxu0 0.0
    %1594 = vmatpush1.msra.mxu0 0.0
    %1595 = vmatprep.subr.mxu0 0.0
    %1596 = vmatpush1.msra.mxu0 0.0
    %1597 = vmatprep.subr.mxu0 0.0
    %1598 = vmatpush1.msra.mxu0 0.0
    %1599 = vmatprep.subr.mxu0 0.0
    %1600 = vmatpush1.msra.mxu0 0.0
    %1601 = vmatprep.subr.mxu0 0.0
    %1602 = vmatpush1.msra.mxu0 0.0
    %1603 = vmatprep.subr.mxu0 0.0
    %1604 = vmatpush1.msra.mxu0 0.0
    %1605 = vmatprep.subr.mxu0 0.0
    %1606 = vmatpush1.msra.mxu0 0.0
    %1607 = vmatprep.subr.mxu0 0.0
    %1608 = vmatpush1.msra.mxu0 0.0
    %1609 = vmatprep.subr.mxu0 0.0
    %1610 = vmatpush1.msra.mxu0 0.0
    %1611 = vmatprep.subr.mxu0 0.0
    %1612 = vmatpush1.msra.mxu0 0.0
    %1613 = vmatprep.subr.mxu0 0.0
    %1614 = vmatpush1.msra.mxu0 0.0
    %1615 = vmatprep.subr.mxu0 0.0
    %1616 = vmatpush1.msra.mxu0 0.0
    %1617 = vmatprep.subr.mxu0 0.0
    %1618 = vmatpush1.msra.mxu0 0.0
    %1619 = vmatprep.subr.mxu0 0.0
    %1620 = vmatpush1.msra.mxu0 0.0
    %1621 = vmatprep.subr.mxu0 0.0
    %1622 = vmatpush1.msra.mxu0 0.0
    %1623 = vmatprep.subr.mxu0 0.0
    %1624 = vmatpush1.msra.mxu0 0.0
    %1625 = vmatprep.subr.mxu0 0.0
    %1626 = vmatpush1.msra.mxu0 0.0
    %1627 = vmatprep.subr.mxu0 0.0
    %1628 = vmatpush1.msra.mxu0 0.0
    %1629 = vmatprep.subr.mxu0 0.0
    %1630 = vmatpush1.msra.mxu0 0.0
    %1631 = vmatprep.subr.mxu0 0.0
    %1632 = vmatpush1.msra.mxu0 0.0
    %1633 = vmatprep.subr.mxu0 0.0
    %1634 = vmatpush1.msra.mxu0 0.0
    %1635 = vmatprep.subr.mxu0 0.0
    %1636 = vmatpush1.msra.mxu0 0.0
    %1637 = vmatprep.subr.mxu0 0.0
    %1638 = vmatpush1.msra.mxu0 0.0
    %1639 = vmatprep.subr.mxu0 0.0
    %1640 = vmatpush1.msra.mxu0 0.0
    %1641 = vmatprep.subr.mxu0 0.0
    %1642 = vmatpush1.msra.mxu0 0.0
    %1643 = vmatprep.mubr.f32.mxu0 0.0
    %1644 = vmatmul.mubr.f32.gmra.mrb[0].mxu0 %v1577
    %v1645 = vpop.f32.mrb[0].mxu0
    %v1646 = vadd.f32 0.0, %v1645
    %v1647 = vpop.f32.mrb[0].mxu0
    %1648 = vdwg.mxu0
    %v1649 = vmul.f32 %v1572, %v1646
    %vm1650 = vcmask 259072
    %v1651 = vsel %vm1650, %v1649, 0.0
    %1652 = vadd.xlane.f32.xlu0 %v1651
    %v1653 = vpop.xlane.xlu0 %1652
    %v1654 = vmul.f32 %v1653, 0.5
    %v1655 = vtanh.pop %v1654
    %v1656 = vmul.f32 %v1655, 0.5
    %v1657 = vadd.f32 %v1656, 0.5
    %vm1658 = vcmask 5120
    %1659 = vst.msk [vmem:[%s10] sm:$0x3f] %vm1658, %v1657
    // Predicated region
    $region58: #{tpu_custom_call.1} parent=1 // pred_check
      _
    $region59: #{tpu_custom_call.1} parent=1 // pred_check_branch
      %1661 = sbr.rel (0) target = $region61
    $region60: #{tpu_custom_call.1} parent=1 // pred_region
      _
    $region61: #{tpu_custom_call.1} parent=1 // pred_fallthru
      _
    // Predicated region
    $region62: #{tpu_custom_call.1} parent=1 // pred_check
      _
    $region63: #{tpu_custom_call.1} parent=1 // pred_check_branch
      %1663 = sbr.rel (0) target = $region65
    $region64: #{tpu_custom_call.1} parent=1 // pred_region
      _
    $region65: #{tpu_custom_call.1} parent=1 // pred_fallthru
      _
    %1664 = vsyncpa [#allocation5], 1
    %1665 = vsyncpa [#allocation7], 1
    %1666 = vsyncpa [#allocation10], 1

</llo_original>
